<compile_context>
chip_gen: v7x
topology: tpu7x:2x2x1
jax: 0.10.0
libtpu: 0.0.40
codegen_flags: <defaults>
</compile_context>

<pallas_src>
import functools

import jax
import jax.numpy as jnp
from jax.experimental import pallas as pl
from jax.experimental.pallas import tpu as pltpu


def _round_up(n, m):
    return ((n + m - 1) // m) * m


def _vmem_limit_bytes(bytes_needed):
    """Footprint-based VMEM limit, clamped to ~90% of this generation's VMEM."""
    try:
        cap = int(pltpu.get_tpu_info().vmem_capacity_bytes)   # 128 MiB v5e/v6e, 64 MiB v7x
    except Exception:
        cap = 64 * 1024 * 1024                                # conservative v7x floor
    want = max(2 * int(bytes_needed) + (4 << 20), 32 << 20)
    return int(min(want, int(cap * 0.9)))


# ---------------------------------------------------------------------------
# Kernels
# ---------------------------------------------------------------------------
def _gcn_layer_kernel(a_ref, x_ref, w_ref, b_ref, o_ref, *, block_rows, residual):
    """One GCNConv(normalize=False, aggr='add') layer on one row-tile of A.

      out[rows, :] = [x[rows, :] +] (A[rows, :] @ x) @ W + b

    A tiles arrive in bf16 (dominant HBM traffic, native MXU dtype); x is
    resident in f32 and only cast to A's dtype as an MXU operand, so bias add
    and residual stay f32.  (A@x)@W vs A@(x@W) is equivalent math; it is used
    only because the per-tile intermediate is (block_rows, Fin) — it is not an
    MXU-pass saving at these feature widths.
    """
    a = a_ref[...]                                                    # (TR, Npad)
    ax = jnp.dot(a, x_ref[...].astype(a.dtype),
                 preferred_element_type=jnp.float32)                  # (TR, Fin) f32 acc
    y = jnp.dot(ax, w_ref[...], preferred_element_type=jnp.float32) + b_ref[...]
    if residual:
        r0 = pl.multiple_of(pl.program_id(0) * block_rows, 8)
        y = y + x_ref[pl.ds(r0, block_rows), :]
    o_ref[...] = y


def _pool_head_kernel(pool_ref, x_ref, wh_ref, bh_ref, o_ref):
    """global_add_pool + folded (lins, lin1) head:  out = P @ (x @ Wh) + bh."""
    v = jnp.dot(x_ref[...], wh_ref[...], preferred_element_type=jnp.float32)    # (Npad, 1)
    o_ref[...] = jnp.dot(pool_ref[...], v, preferred_element_type=jnp.float32) + bh_ref[...]
    # TODO(synk): for large B emit a lane-dense (1, B) output to avoid masked
    # width-1 stores; at B~2 this is noise.


# ---------------------------------------------------------------------------
# pallas_call wrappers
# ---------------------------------------------------------------------------
def _gcn_layer(a, x, w, b, *, residual, block_rows):
    n_pad = a.shape[0]
    fin, fout = w.shape
    grid = n_pad // block_rows
    need = (2 * block_rows * n_pad * a.dtype.itemsize      # double-buffered A tiles
            + x.size * x.dtype.itemsize                    # resident x
            + w.size * 4 + b.size * 4
            + 2 * block_rows * fout * 4)                   # double-buffered out tiles
    return pl.pallas_call(
        functools.partial(_gcn_layer_kernel, block_rows=block_rows, residual=residual),
        out_shape=jax.ShapeDtypeStruct((n_pad, fout), jnp.float32),
        grid=(grid,),
        in_specs=[
            pl.BlockSpec((block_rows, n_pad), lambda i: (i, 0)),   # A row tile (pipelined)
            pl.BlockSpec((n_pad, fin), lambda i: (0, 0)),          # x resident (fetched once)
            pl.BlockSpec((fin, fout), lambda i: (0, 0)),           # W resident
            pl.BlockSpec((1, fout), lambda i: (0, 0)),             # b resident
        ],
        out_specs=pl.BlockSpec((block_rows, fout), lambda i: (i, 0)),
        compiler_params=pltpu.CompilerParams(
            dimension_semantics=("parallel",),        # v7x: two TensorCores split row tiles
            vmem_limit_bytes=_vmem_limit_bytes(need)),
    )(a, x, w, b)


def _pool_head(pool, x, wh, bh):
    b = pool.shape[0]
    need = (pool.size + x.size + wh.size + bh.size + b) * 4
    vmem = pl.BlockSpec(memory_space=pltpu.MemorySpace.VMEM)
    return pl.pallas_call(
        _pool_head_kernel,
        out_shape=jax.ShapeDtypeStruct((b, 1), jnp.float32),
        in_specs=[vmem, vmem, vmem, vmem],
        out_specs=vmem,
        compiler_params=pltpu.CompilerParams(vmem_limit_bytes=_vmem_limit_bytes(need)),
    )(pool, x, wh, bh)


# ---------------------------------------------------------------------------
# One-time prep (hoisted out of the per-call path per review)
# ---------------------------------------------------------------------------
def fold_head(params):
    """Collapse the activation-free head (self.lins + self.lin1) into one matvec.

    Valid because forward() applies no activation / BatchNorm between them."""
    wh = params["wl1"] @ params["wl2"] @ params["wout"]                     # (H, 1)
    bh = (params["bl1"] @ params["wl2"] @ params["wout"]
          + params["bl2"] @ params["wout"] + params["bout"])                # (1, 1)
    return wh.astype(jnp.float32), bh.astype(jnp.float32)


def prepare_params(params):
    """Once per weight update: fold head, cast everything the kernels need to f32."""
    p = {k: params[k].astype(jnp.float32)
         for k in ("w1", "b1", "w2", "b2", "w3", "b3")}
    p["wh"], p["bh"] = fold_head(params)
    return p


def prepare_graph(x, a_train, a_adj, a_pass, pool, *, row_tile=256,
                  adj_dtype=jnp.bfloat16):
    """Once per graph batch: pad node count to the row tile and cast the dominant
    (N,N) adjacencies to adj_dtype (bf16 halves HBM traffic; f32 for exactness).
    Padded rows/cols are zero, so they never leak into real outputs."""
    assert row_tile % 16 == 0
    n = x.shape[0]
    n_pad = _round_up(n, 16)
    if n_pad > row_tile:
        n_pad = _round_up(n_pad, row_tile)
        block_rows = row_tile
    else:
        block_rows = n_pad
    pad_n = n_pad - n

    def pad_adj(a):
        return jnp.pad(a.astype(jnp.float32), ((0, pad_n), (0, pad_n))).astype(adj_dtype)

    xp = jnp.pad(x.astype(jnp.float32), ((0, pad_n), (0, 0)))
    poolp = jnp.pad(pool.astype(jnp.float32), ((0, 0), (0, pad_n)))
    return (xp, pad_adj(a_train), pad_adj(a_adj), pad_adj(a_pass), poolp), block_rows


@functools.partial(jax.jit, static_argnames=("block_rows",))
def value_net_forward(xp, a_train, a_adj, a_pass, poolp, params, *, block_rows):
    # x += conv1(x, train_adj, w)  (residual, F->F)
    x = _gcn_layer(a_train, xp, params["w1"], params["b1"],
                   residual=True, block_rows=block_rows)
    # x = conv2(x, adj, w)         (F->H)
    x = _gcn_layer(a_adj, x, params["w2"], params["b2"],
                   residual=False, block_rows=block_rows)
    # x = conv3(x, pass_adj, w)    (H->H)
    x = _gcn_layer(a_pass, x, params["w3"], params["b3"],
                   residual=False, block_rows=block_rows)
    # global_add_pool + folded (lins, lin1) head -> (B, 1)
    return _pool_head(poolp, x, params["wh"], params["bh"])


# ---------------------------------------------------------------------------
# Plain-JAX glue + references
# ---------------------------------------------------------------------------
def dense_adj(src, dst, w, n_nodes):
    # A[dst, src] = edge_weight  (messages flow source -> target, add-aggregated)
    a = jnp.zeros((n_nodes, n_nodes), jnp.float32)
    return a.at[dst, src].add(w)


def pool_matrix(batch, n_graphs):
    return (batch[None, :] == jnp.arange(n_graphs)[:, None]).astype(jnp.float32)


def reference_forward(x, a_train, a_adj, a_pass, pool, p):
    """Exact f32 mirror of the original (unfused) module forward."""
    x = x + (a_train @ (x @ p["w1"]) + p["b1"])
    x = a_adj @ (x @ p["w2"]) + p["b2"]
    x = a_pass @ (x @ p["w3"]) + p["b3"]
    g = pool @ x
    g = g @ p["wl1"] + p["bl1"]
    g = g @ p["wl2"] + p["bl2"]
    return g @ p["wout"] + p["bout"]


def reference_forward_bf16_operands(x, a_train, a_adj, a_pass, pool, p, wh, bh):
    """Mirrors the kernel's bf16 MXU operands (adjacency + x at the aggregation)
    while keeping f32 accumulation/elementwise — for a tight numeric check."""
    def agg(a, xx):
        a16 = a.astype(jnp.bfloat16).astype(jnp.float32)
        x16 = xx.astype(jnp.bfloat16).astype(jnp.float32)
        return a16 @ x16
    x = x + agg(a_train, x) @ p["w1"] + p["b1"]
    x = agg(a_adj, x) @ p["w2"] + p["b2"]
    x = agg(a_pass, x) @ p["w3"] + p["b3"]
    return pool @ (x @ wh) + bh


if __name__ == "__main__":
    # Config (synthetic): n_node_features=8, hidden_neurons=32, aggr='add'
    F, H = 8, 32
    N, B, E = 120, 2, 240       # packed nodes, graphs, edges per adjacency
    ROW_TILE = 64               # small tile so the demo exercises a multi-step grid + padding

    key = jax.random.PRNGKey(0)
    ks = jax.random.split(key, 24)

    x = jax.random.normal(ks[0], (N, F), jnp.float32)
    batch = jnp.concatenate([jnp.zeros(N // 2, jnp.int32),
                             jnp.ones(N - N // 2, jnp.int32)])

    def make_adj(k1, k2, k3):
        src = jax.random.randint(k1, (E,), 0, N)
        dst = jax.random.randint(k2, (E,), 0, N)
        w = jax.random.uniform(k3, (E,), jnp.float32)
        return dense_adj(src, dst, w, N)

    a_train = make_adj(ks[1], ks[2], ks[3])
    a_adj = make_adj(ks[4], ks[5], ks[6])
    a_pass = make_adj(ks[7], ks[8], ks[9])
    pool = pool_matrix(batch, B)

    def init(k, fan_in, fan_out):
        s = (1.0 / fan_in) ** 0.5
        return jax.random.uniform(k, (fan_in, fan_out), jnp.float32, -s, s)

    params = {
        "w1": init(ks[10], F, F),  "b1": jax.random.normal(ks[11], (1, F), jnp.float32) * 0.01,
        "w2": init(ks[12], F, H),  "b2": jax.random.normal(ks[13], (1, H), jnp.float32) * 0.01,
        "w3": init(ks[14], H, H),  "b3": jax.random.normal(ks[15], (1, H), jnp.float32) * 0.01,
        "wl1": init(ks[16], H, H), "bl1": jax.random.normal(ks[17], (1, H), jnp.float32) * 0.01,
        "wl2": init(ks[18], H, H), "bl2": jax.random.normal(ks[19], (1, H), jnp.float32) * 0.01,
        "wout": init(ks[20], H, 1), "bout": jax.random.normal(ks[21], (1, 1), jnp.float32) * 0.01,
    }

    packed = prepare_params(params)                      # one-time (hoisted) param prep
    ref = reference_forward(x, a_train, a_adj, a_pass, pool, params)

    # --- exactness path: f32 adjacencies -----------------------------------
    (xp, a1, a2, a3, poolp), br = prepare_graph(
        x, a_train, a_adj, a_pass, pool, row_tile=ROW_TILE, adj_dtype=jnp.float32)
    out_f32 = jax.block_until_ready(
        value_net_forward(xp, a1, a2, a3, poolp, packed, block_rows=br))
    assert out_f32.shape == (B, 1)
    assert jnp.allclose(out_f32, ref, atol=1e-3, rtol=1e-3), (out_f32, ref)

    # --- fast path: bf16 adjacency MXU operands (default) ------------------
    (xp, a1, a2, a3, poolp), br = prepare_graph(
        x, a_train, a_adj, a_pass, pool, row_tile=ROW_TILE, adj_dtype=jnp.bfloat16)
    out_bf16 = jax.block_until_ready(
        value_net_forward(xp, a1, a2, a3, poolp, packed, block_rows=br))
    ref_bf16 = reference_forward_bf16_operands(
        x, a_train, a_adj, a_pass, pool, params, packed["wh"], packed["bh"])
    assert out_bf16.shape == (B, 1)
    # tight check vs. a reference that mirrors the kernel's bf16 operand rounding
    assert jnp.allclose(out_bf16, ref_bf16, atol=1e-3, rtol=1e-3), (out_bf16, ref_bf16)
    # loose drift-sanity check vs. the exact f32 module semantics
    assert jnp.allclose(out_bf16, ref, atol=1.0, rtol=1e-1), (out_bf16, ref)

    print("KERNEL_OK")
</pallas_src>

<mosaic_0001>
module attributes {stable_mosaic.version = 11 : i64} {
  func.func @_gcn_layer_kernel(%arg0: i32, %arg1: memref<64x128xf32, #tpu.memory_space<vmem>>, %arg2: memref<128x8xf32, #tpu.memory_space<vmem>>, %arg3: memref<8x8xf32, #tpu.memory_space<vmem>>, %arg4: memref<1x8xf32, #tpu.memory_space<vmem>>, %arg5: memref<64x8xf32, #tpu.memory_space<vmem>>) attributes {dimension_semantics = [#tpu.dimension_semantics<parallel>], iteration_bounds = array<i64: 2>, scalar_prefetch = 0 : i64, scratch_operands = 0 : i64, tpu.core_type = #tpu.core_type<tc>, window_params = [{transform_indices = @transform_0, window_bounds = array<i64: 64, 128>}, {pipeline_mode = #tpu.pipeline_mode<synchronous>, transform_indices = @transform_1, window_bounds = array<i64: 128, 8>}, {pipeline_mode = #tpu.pipeline_mode<synchronous>, transform_indices = @transform_2, window_bounds = array<i64: 8, 8>}, {pipeline_mode = #tpu.pipeline_mode<synchronous>, transform_indices = @transform_3, window_bounds = array<i64: 1, 8>}, {transform_indices = @transform_4, window_bounds = array<i64: 64, 8>}]} {
    %c0 = arith.constant 0 : index
    %c0_0 = arith.constant 0 : index
    %0 = vector.load %arg1[%c0, %c0_0] : memref<64x128xf32, #tpu.memory_space<vmem>>, vector<64x128xf32>
    %c0_1 = arith.constant 0 : index
    %c0_2 = arith.constant 0 : index
    %1 = vector.load %arg2[%c0_1, %c0_2] : memref<128x8xf32, #tpu.memory_space<vmem>>, vector<128x8xf32>
    %cst = arith.constant dense<0.000000e+00> : vector<64x8xf32>
    %2 = tpu.matmul %0, %1, %cst {dimension_numbers = #tpu.dot_dimension_numbers<[1], [0], [0], [1], [0, 0, 1, 1], [], []>} : vector<64x128xf32>, vector<128x8xf32>, vector<64x8xf32> -> vector<64x8xf32>
    %c0_3 = arith.constant 0 : index
    %c0_4 = arith.constant 0 : index
    %3 = vector.load %arg3[%c0_3, %c0_4] : memref<8x8xf32, #tpu.memory_space<vmem>>, vector<8x8xf32>
    %cst_5 = arith.constant dense<0.000000e+00> : vector<64x8xf32>
    %4 = tpu.matmul %2, %3, %cst_5 {dimension_numbers = #tpu.dot_dimension_numbers<[1], [0], [0], [1], [0, 0, 1, 1], [], []>} : vector<64x8xf32>, vector<8x8xf32>, vector<64x8xf32> -> vector<64x8xf32>
    %c0_6 = arith.constant 0 : index
    %c0_7 = arith.constant 0 : index
    %5 = vector.load %arg4[%c0_6, %c0_7] : memref<1x8xf32, #tpu.memory_space<vmem>>, vector<1x8xf32>
    %6 = vector.broadcast %5 : vector<1x8xf32> to vector<64x8xf32>
    %7 = arith.addf %4, %6 : vector<64x8xf32>
    %c64_i32 = arith.constant 64 : i32
    %8 = arith.muli %arg0, %c64_i32 : i32
    %9 = tpu.assume_multiple %8, 8 : i32
    %10 = arith.index_cast %9 : i32 to index
    %c0_8 = arith.constant 0 : index
    %11 = vector.load %arg2[%10, %c0_8] : memref<128x8xf32, #tpu.memory_space<vmem>>, vector<64x8xf32>
    %12 = arith.addf %7, %11 : vector<64x8xf32>
    %c0_9 = arith.constant 0 : index
    %c0_10 = arith.constant 0 : index
    %13 = vector.load %arg5[%c0_9, %c0_10] : memref<64x8xf32, #tpu.memory_space<vmem>>, vector<64x8xf32>
    tpu.vector_store %arg5[%c0_9, %c0_10], %12 {strides = array<i32>} : memref<64x8xf32, #tpu.memory_space<vmem>>, vector<64x8xf32>,
    return
  }
  func.func @transform_0(%arg0: i32) -> (i32, i32) {
    %c0_i32 = arith.constant 0 : i32
    %c0_i32_0 = arith.constant 0 : i32
    return %arg0, %c0_i32 : i32, i32
  }
  func.func @transform_1(%arg0: i32) -> (i32, i32) {
    %c0_i32 = arith.constant 0 : i32
    %c0_i32_0 = arith.constant 0 : i32
    %c0_i32_1 = arith.constant 0 : i32
    return %c0_i32, %c0_i32_0 : i32, i32
  }
  func.func @transform_2(%arg0: i32) -> (i32, i32) {
    %c0_i32 = arith.constant 0 : i32
    %c0_i32_0 = arith.constant 0 : i32
    %c0_i32_1 = arith.constant 0 : i32
    return %c0_i32, %c0_i32_0 : i32, i32
  }
  func.func @transform_3(%arg0: i32) -> (i32, i32) {
    %c0_i32 = arith.constant 0 : i32
    %c0_i32_0 = arith.constant 0 : i32
    %c0_i32_1 = arith.constant 0 : i32
    return %c0_i32, %c0_i32_0 : i32, i32
  }
  func.func @transform_4(%arg0: i32) -> (i32, i32) {
    %c0_i32 = arith.constant 0 : i32
    %c0_i32_0 = arith.constant 0 : i32
    return %arg0, %c0_i32 : i32, i32
  }
}

module attributes {stable_mosaic.version = 11 : i64} {
  func.func @_gcn_layer_kernel(%arg0: i32, %arg1: memref<64x128xf32, #tpu.memory_space<vmem>>, %arg2: memref<128x32xf32, #tpu.memory_space<vmem>>, %arg3: memref<32x32xf32, #tpu.memory_space<vmem>>, %arg4: memref<1x32xf32, #tpu.memory_space<vmem>>, %arg5: memref<64x32xf32, #tpu.memory_space<vmem>>) attributes {dimension_semantics = [#tpu.dimension_semantics<parallel>], iteration_bounds = array<i64: 2>, scalar_prefetch = 0 : i64, scratch_operands = 0 : i64, tpu.core_type = #tpu.core_type<tc>, window_params = [{transform_indices = @transform_0, window_bounds = array<i64: 64, 128>}, {pipeline_mode = #tpu.pipeline_mode<synchronous>, transform_indices = @transform_1, window_bounds = array<i64: 128, 32>}, {pipeline_mode = #tpu.pipeline_mode<synchronous>, transform_indices = @transform_2, window_bounds = array<i64: 32, 32>}, {pipeline_mode = #tpu.pipeline_mode<synchronous>, transform_indices = @transform_3, window_bounds = array<i64: 1, 32>}, {transform_indices = @transform_4, window_bounds = array<i64: 64, 32>}]} {
    %c0 = arith.constant 0 : index
    %c0_0 = arith.constant 0 : index
    %0 = vector.load %arg1[%c0, %c0_0] : memref<64x128xf32, #tpu.memory_space<vmem>>, vector<64x128xf32>
    %c0_1 = arith.constant 0 : index
    %c0_2 = arith.constant 0 : index
    %1 = vector.load %arg2[%c0_1, %c0_2] : memref<128x32xf32, #tpu.memory_space<vmem>>, vector<128x32xf32>
    %cst = arith.constant dense<0.000000e+00> : vector<64x32xf32>
    %2 = tpu.matmul %0, %1, %cst {dimension_numbers = #tpu.dot_dimension_numbers<[1], [0], [0], [1], [0, 0, 1, 1], [], []>} : vector<64x128xf32>, vector<128x32xf32>, vector<64x32xf32> -> vector<64x32xf32>
    %c0_3 = arith.constant 0 : index
    %c0_4 = arith.constant 0 : index
    %3 = vector.load %arg3[%c0_3, %c0_4] : memref<32x32xf32, #tpu.memory_space<vmem>>, vector<32x32xf32>
    %cst_5 = arith.constant dense<0.000000e+00> : vector<64x32xf32>
    %4 = tpu.matmul %2, %3, %cst_5 {dimension_numbers = #tpu.dot_dimension_numbers<[1], [0], [0], [1], [0, 0, 1, 1], [], []>} : vector<64x32xf32>, vector<32x32xf32>, vector<64x32xf32> -> vector<64x32xf32>
    %c0_6 = arith.constant 0 : index
    %c0_7 = arith.constant 0 : index
    %5 = vector.load %arg4[%c0_6, %c0_7] : memref<1x32xf32, #tpu.memory_space<vmem>>, vector<1x32xf32>
    %6 = vector.broadcast %5 : vector<1x32xf32> to vector<64x32xf32>
    %7 = arith.addf %4, %6 : vector<64x32xf32>
    %c0_8 = arith.constant 0 : index
    %c0_9 = arith.constant 0 : index
    %8 = vector.load %arg5[%c0_8, %c0_9] : memref<64x32xf32, #tpu.memory_space<vmem>>, vector<64x32xf32>
    tpu.vector_store %arg5[%c0_8, %c0_9], %7 {strides = array<i32>} : memref<64x32xf32, #tpu.memory_space<vmem>>, vector<64x32xf32>,
    return
  }
  func.func @transform_0(%arg0: i32) -> (i32, i32) {
    %c0_i32 = arith.constant 0 : i32
    %c0_i32_0 = arith.constant 0 : i32
    return %arg0, %c0_i32 : i32, i32
  }
  func.func @transform_1(%arg0: i32) -> (i32, i32) {
    %c0_i32 = arith.constant 0 : i32
    %c0_i32_0 = arith.constant 0 : i32
    %c0_i32_1 = arith.constant 0 : i32
    return %c0_i32, %c0_i32_0 : i32, i32
  }
  func.func @transform_2(%arg0: i32) -> (i32, i32) {
    %c0_i32 = arith.constant 0 : i32
    %c0_i32_0 = arith.constant 0 : i32
    %c0_i32_1 = arith.constant 0 : i32
    return %c0_i32, %c0_i32_0 : i32, i32
  }
  func.func @transform_3(%arg0: i32) -> (i32, i32) {
    %c0_i32 = arith.constant 0 : i32
    %c0_i32_0 = arith.constant 0 : i32
    %c0_i32_1 = arith.constant 0 : i32
    return %c0_i32, %c0_i32_0 : i32, i32
  }
  func.func @transform_4(%arg0: i32) -> (i32, i32) {
    %c0_i32 = arith.constant 0 : i32
    %c0_i32_0 = arith.constant 0 : i32
    return %arg0, %c0_i32 : i32, i32
  }
}

module attributes {stable_mosaic.version = 11 : i64} {
  func.func @_gcn_layer_kernel(%arg0: i32, %arg1: memref<64x128xf32, #tpu.memory_space<vmem>>, %arg2: memref<128x8xf32, #tpu.memory_space<vmem>>, %arg3: memref<8x32xf32, #tpu.memory_space<vmem>>, %arg4: memref<1x32xf32, #tpu.memory_space<vmem>>, %arg5: memref<64x32xf32, #tpu.memory_space<vmem>>) attributes {dimension_semantics = [#tpu.dimension_semantics<parallel>], iteration_bounds = array<i64: 2>, scalar_prefetch = 0 : i64, scratch_operands = 0 : i64, tpu.core_type = #tpu.core_type<tc>, window_params = [{transform_indices = @transform_0, window_bounds = array<i64: 64, 128>}, {pipeline_mode = #tpu.pipeline_mode<synchronous>, transform_indices = @transform_1, window_bounds = array<i64: 128, 8>}, {pipeline_mode = #tpu.pipeline_mode<synchronous>, transform_indices = @transform_2, window_bounds = array<i64: 8, 32>}, {pipeline_mode = #tpu.pipeline_mode<synchronous>, transform_indices = @transform_3, window_bounds = array<i64: 1, 32>}, {transform_indices = @transform_4, window_bounds = array<i64: 64, 32>}]} {
    %c0 = arith.constant 0 : index
    %c0_0 = arith.constant 0 : index
    %0 = vector.load %arg1[%c0, %c0_0] : memref<64x128xf32, #tpu.memory_space<vmem>>, vector<64x128xf32>
    %c0_1 = arith.constant 0 : index
    %c0_2 = arith.constant 0 : index
    %1 = vector.load %arg2[%c0_1, %c0_2] : memref<128x8xf32, #tpu.memory_space<vmem>>, vector<128x8xf32>
    %cst = arith.constant dense<0.000000e+00> : vector<64x8xf32>
    %2 = tpu.matmul %0, %1, %cst {dimension_numbers = #tpu.dot_dimension_numbers<[1], [0], [0], [1], [0, 0, 1, 1], [], []>} : vector<64x128xf32>, vector<128x8xf32>, vector<64x8xf32> -> vector<64x8xf32>
    %c0_3 = arith.constant 0 : index
    %c0_4 = arith.constant 0 : index
    %3 = vector.load %arg3[%c0_3, %c0_4] : memref<8x32xf32, #tpu.memory_space<vmem>>, vector<8x32xf32>
    %cst_5 = arith.constant dense<0.000000e+00> : vector<64x32xf32>
    %4 = tpu.matmul %2, %3, %cst_5 {dimension_numbers = #tpu.dot_dimension_numbers<[1], [0], [0], [1], [0, 0, 1, 1], [], []>} : vector<64x8xf32>, vector<8x32xf32>, vector<64x32xf32> -> vector<64x32xf32>
    %c0_6 = arith.constant 0 : index
    %c0_7 = arith.constant 0 : index
    %5 = vector.load %arg4[%c0_6, %c0_7] : memref<1x32xf32, #tpu.memory_space<vmem>>, vector<1x32xf32>
    %6 = vector.broadcast %5 : vector<1x32xf32> to vector<64x32xf32>
    %7 = arith.addf %4, %6 : vector<64x32xf32>
    %c0_8 = arith.constant 0 : index
    %c0_9 = arith.constant 0 : index
    %8 = vector.load %arg5[%c0_8, %c0_9] : memref<64x32xf32, #tpu.memory_space<vmem>>, vector<64x32xf32>
    tpu.vector_store %arg5[%c0_8, %c0_9], %7 {strides = array<i32>} : memref<64x32xf32, #tpu.memory_space<vmem>>, vector<64x32xf32>,
    return
  }
  func.func @transform_0(%arg0: i32) -> (i32, i32) {
    %c0_i32 = arith.constant 0 : i32
    %c0_i32_0 = arith.constant 0 : i32
    return %arg0, %c0_i32 : i32, i32
  }
  func.func @transform_1(%arg0: i32) -> (i32, i32) {
    %c0_i32 = arith.constant 0 : i32
    %c0_i32_0 = arith.constant 0 : i32
    %c0_i32_1 = arith.constant 0 : i32
    return %c0_i32, %c0_i32_0 : i32, i32
  }
  func.func @transform_2(%arg0: i32) -> (i32, i32) {
    %c0_i32 = arith.constant 0 : i32
    %c0_i32_0 = arith.constant 0 : i32
    %c0_i32_1 = arith.constant 0 : i32
    return %c0_i32, %c0_i32_0 : i32, i32
  }
  func.func @transform_3(%arg0: i32) -> (i32, i32) {
    %c0_i32 = arith.constant 0 : i32
    %c0_i32_0 = arith.constant 0 : i32
    %c0_i32_1 = arith.constant 0 : i32
    return %c0_i32, %c0_i32_0 : i32, i32
  }
  func.func @transform_4(%arg0: i32) -> (i32, i32) {
    %c0_i32 = arith.constant 0 : i32
    %c0_i32_0 = arith.constant 0 : i32
    return %arg0, %c0_i32 : i32, i32
  }
}

module attributes {stable_mosaic.version = 11 : i64} {
  func.func @_pool_head_kernel(%arg0: memref<2x128xf32, #tpu.memory_space<vmem>>, %arg1: memref<128x32xf32, #tpu.memory_space<vmem>>, %arg2: memref<32x1xf32, #tpu.memory_space<vmem>>, %arg3: memref<1x1xf32, #tpu.memory_space<vmem>>, %arg4: memref<2x1xf32, #tpu.memory_space<vmem>>) attributes {dimension_semantics = [], scalar_prefetch = 0 : i64, scratch_operands = 0 : i64, tpu.core_type = #tpu.core_type<tc>} {
    %c0 = arith.constant 0 : index
    %c0_0 = arith.constant 0 : index
    %0 = vector.load %arg1[%c0, %c0_0] : memref<128x32xf32, #tpu.memory_space<vmem>>, vector<128x32xf32>
    %c0_1 = arith.constant 0 : index
    %c0_2 = arith.constant 0 : index
    %1 = vector.load %arg2[%c0_1, %c0_2] : memref<32x1xf32, #tpu.memory_space<vmem>>, vector<32x1xf32>
    %cst = arith.constant dense<0.000000e+00> : vector<128x1xf32>
    %2 = tpu.matmul %0, %1, %cst {dimension_numbers = #tpu.dot_dimension_numbers<[1], [0], [0], [1], [0, 0, 1, 1], [], []>} : vector<128x32xf32>, vector<32x1xf32>, vector<128x1xf32> -> vector<128x1xf32>
    %c0_3 = arith.constant 0 : index
    %c0_4 = arith.constant 0 : index
    %3 = vector.load %arg0[%c0_3, %c0_4] : memref<2x128xf32, #tpu.memory_space<vmem>>, vector<2x128xf32>
    %cst_5 = arith.constant dense<0.000000e+00> : vector<2x1xf32>
    %4 = tpu.matmul %3, %2, %cst_5 {dimension_numbers = #tpu.dot_dimension_numbers<[1], [0], [0], [1], [0, 0, 1, 1], [], []>} : vector<2x128xf32>, vector<128x1xf32>, vector<2x1xf32> -> vector<2x1xf32>
    %c0_6 = arith.constant 0 : index
    %c0_7 = arith.constant 0 : index
    %5 = vector.load %arg3[%c0_6, %c0_7] : memref<1x1xf32, #tpu.memory_space<vmem>>, vector<1x1xf32>
    %6 = vector.broadcast %5 : vector<1x1xf32> to vector<2x1xf32>
    %7 = arith.addf %4, %6 : vector<2x1xf32>
    %c0_8 = arith.constant 0 : index
    %c0_9 = arith.constant 0 : index
    %8 = vector.load %arg4[%c0_8, %c0_9] : memref<2x1xf32, #tpu.memory_space<vmem>>, vector<2x1xf32>
    tpu.vector_store %arg4[%c0_8, %c0_9], %7 {strides = array<i32>} : memref<2x1xf32, #tpu.memory_space<vmem>>, vector<2x1xf32>,
    return
  }
}

</mosaic_0001>

<llo_original>
// kernel: value_net_forward.5
$region0: #{value_net_forward.5}
  #allocation0 [shape = 'u32[]', space=smem, size = 0x4, offset = 0x4, fixed_abs, tag = 'smem constant byte address 0x4 - core index']
  #allocation1 [shape = 'u32[144,128]{1,0:T(1,128)}', space=vmem, size = 0x12000, scoped, tag = 'internal scratch']
  %s0 = inlined_call_operand.vmem [shape: f32[128,128], index: 0, kind: input, shape index: {}]
  %s1 = inlined_call_operand.vmem [shape: f32[128,8], index: 1, kind: input, shape index: {}]
  %s2 = inlined_call_operand.vmem [shape: f32[8,32], index: 2, kind: input, shape index: {}]
  %s3 = inlined_call_operand.vmem [shape: f32[1,32], index: 3, kind: input, shape index: {}]
  %s4 = inlined_call_operand.vmem [shape: f32[128,32], index: 4, kind: output, shape index: {}]
  %s5 = sld [smem:[#allocation0]]
  $region49: #{value_net_forward.5} parent=0
    _
  %s7 = ssub.s32 1, %s5
  %s8 = scalar_select 0, %s7, %s5
  loop: start=0, step=1, limit=4
  $region2: #{value_net_forward.5} parent=0 // loop_pre_header
    _
  $region3: #{value_net_forward.5} parent=0 // loop_header
    %s10 = sphi 0, %s14
    %p11 = scmp.ge.s32.totalorder %s10, 4
    %s20 = sphi 0, %s22
    %s23 = sphi 0, %s20
    %s24 = sphi 0, %s23
    %s40 = sphi 0, %s24
    %s44 = sphi 0, %s44
    %s46 = sphi 0, %s44
    %s47 = sphi 0, %s46
    %s61 = sphi 0, %s47
    %s65 = sphi 0, %s65
    %s67 = sphi 0, %s65
    %s68 = sphi 0, %s67
    %s82 = sphi 0, %s68
    %s86 = sphi 0, %s86
    %s88 = sphi 0, %s86
    %s89 = sphi 0, %s88
    %s103 = sphi 0, %s89
    %s109 = sphi 0, %s111
    %s112 = sphi 0, %s109
    %s113 = sphi 0, %s112
    %s129 = sphi 0, %s113
  $region4: #{value_net_forward.5} parent=0 // loop_header_branch
    %13 = sbr.rel (%p11) target = $region8
  $region5: #{value_net_forward.5} parent=0 // loop_body
    %s15 = ssub.s32 %s10, 1
    %s16 = ssub.s32 %s10, 2
    %s17 = sadd.s32 %s10, 1
    %s18 = ssub.s32 %s10, %s17
    %p19 = scmp.eq.s32.totalorder %s18, 0
    %s21 = sadd.s32 %s20, 1
    %s22 = scalar_select %p19, %s20, %s21
    %p25 = pneg %p19
    %p26 = scmp.eq.s32.totalorder %s10, 1
    %p27 = por %p25, %p26
    %p28 = scmp.ne.s32.totalorder %s20, %s23
    %p29 = scmp.eq.s32.totalorder %s10, 0
    %p30 = por %p28, %p29
    %p31 = scmp.ne.s32.totalorder %s20, %s23
    %p32 = scmp.eq.s32.totalorder %s15, 1
    %p33 = por %p31, %p32
    %p34 = scmp.ne.s32.totalorder %s23, %s24
    %p35 = scmp.eq.s32.totalorder %s15, 0
    %p36 = por %p34, %p35
    %p37 = scmp.ne.s32.totalorder %s23, %s24
    %p38 = scmp.eq.s32.totalorder %s16, 1
    %p39 = por %p37, %p38
    %p41 = scmp.ne.s32.totalorder %s24, %s40
    %p42 = scmp.eq.s32.totalorder %s16, 0
    %p43 = por %p41, %p42
    %s45 = sadd.s32 %s44, 1
    %p48 = scmp.eq.s32.totalorder %s10, 1
    %p49 = scmp.ne.s32.totalorder %s44, %s46
    %p50 = scmp.eq.s32.totalorder %s10, 0
    %p51 = por %p49, %p50
    %p52 = scmp.ne.s32.totalorder %s44, %s46
    %p53 = scmp.eq.s32.totalorder %s15, 1
    %p54 = por %p52, %p53
    %p55 = scmp.ne.s32.totalorder %s46, %s47
    %p56 = scmp.eq.s32.totalorder %s15, 0
    %p57 = por %p55, %p56
    %p58 = scmp.ne.s32.totalorder %s46, %s47
    %p59 = scmp.eq.s32.totalorder %s16, 1
    %p60 = por %p58, %p59
    %p62 = scmp.ne.s32.totalorder %s47, %s61
    %p63 = scmp.eq.s32.totalorder %s16, 0
    %p64 = por %p62, %p63
    %s66 = sadd.s32 %s65, 1
    %p69 = scmp.eq.s32.totalorder %s10, 1
    %p70 = scmp.ne.s32.totalorder %s65, %s67
    %p71 = scmp.eq.s32.totalorder %s10, 0
    %p72 = por %p70, %p71
    %p73 = scmp.ne.s32.totalorder %s65, %s67
    %p74 = scmp.eq.s32.totalorder %s15, 1
    %p75 = por %p73, %p74
    %p76 = scmp.ne.s32.totalorder %s67, %s68
    %p77 = scmp.eq.s32.totalorder %s15, 0
    %p78 = por %p76, %p77
    %p79 = scmp.ne.s32.totalorder %s67, %s68
    %p80 = scmp.eq.s32.totalorder %s16, 1
    %p81 = por %p79, %p80
    %p83 = scmp.ne.s32.totalorder %s68, %s82
    %p84 = scmp.eq.s32.totalorder %s16, 0
    %p85 = por %p83, %p84
    %s87 = sadd.s32 %s86, 1
    %p90 = scmp.eq.s32.totalorder %s10, 1
    %p91 = scmp.ne.s32.totalorder %s86, %s88
    %p92 = scmp.eq.s32.totalorder %s10, 0
    %p93 = por %p91, %p92
    %p94 = scmp.ne.s32.totalorder %s86, %s88
    %p95 = scmp.eq.s32.totalorder %s15, 1
    %p96 = por %p94, %p95
    %p97 = scmp.ne.s32.totalorder %s88, %s89
    %p98 = scmp.eq.s32.totalorder %s15, 0
    %p99 = por %p97, %p98
    %p100 = scmp.ne.s32.totalorder %s88, %s89
    %p101 = scmp.eq.s32.totalorder %s16, 1
    %p102 = por %p100, %p101
    %p104 = scmp.ne.s32.totalorder %s89, %s103
    %p105 = scmp.eq.s32.totalorder %s16, 0
    %p106 = por %p104, %p105
    %s107 = ssub.s32 %s10, %s17
    %p108 = scmp.eq.s32.totalorder %s107, 0
    %s110 = sadd.s32 %s109, 1
    %s111 = scalar_select %p108, %s109, %s110
    %p114 = pneg %p108
    %p115 = scmp.eq.s32.totalorder %s10, 1
    %p116 = por %p114, %p115
    %p117 = scmp.ne.s32.totalorder %s109, %s112
    %p118 = scmp.eq.s32.totalorder %s10, 0
    %p119 = por %p117, %p118
    %p120 = scmp.ne.s32.totalorder %s109, %s112
    %p121 = scmp.eq.s32.totalorder %s15, 1
    %p122 = por %p120, %p121
    %p123 = scmp.ne.s32.totalorder %s112, %s113
    %p124 = scmp.eq.s32.totalorder %s15, 0
    %p125 = por %p123, %p124
    %p126 = scmp.ne.s32.totalorder %s112, %s113
    %p127 = scmp.eq.s32.totalorder %s16, 1
    %p128 = por %p126, %p127
    %p130 = scmp.ne.s32.totalorder %s113, %s129
    %p131 = scmp.eq.s32.totalorder %s16, 0
    %p132 = por %p130, %p131
    %p133 = scmp.le.s32.totalorder 1, %s10
    %p134 = scmp.lt.s32.totalorder %s10, 3
    %p135 = pnand %p133, %p134
    %p136 = pneg %p135
    // Predicated region
    $region9: #{value_net_forward.5} parent=5 // pred_check
      _
    $region10: #{value_net_forward.5} parent=5 // pred_check_branch
      %138 = sbr.rel (%p135) target = $region12
    $region11: #{value_net_forward.5} parent=5 // pred_region
      %s139 = ssub.s32 %s10, 1
      // Predicated region
      $region13: #{value_net_forward.5} parent=11 // pred_check
        %p140 = pneg %p57
      $region14: #{value_net_forward.5} parent=11 // pred_check_branch
        %142 = sbr.rel (%p140) target = $region16
      $region15: #{value_net_forward.5} parent=11 // pred_region
        _
      $region16: #{value_net_forward.5} parent=11 // pred_fallthru
        _
      // Predicated region
      $region17: #{value_net_forward.5} parent=11 // pred_check
        %p143 = pneg %p78
      $region18: #{value_net_forward.5} parent=11 // pred_check_branch
        %145 = sbr.rel (%p143) target = $region20
      $region19: #{value_net_forward.5} parent=11 // pred_region
        _
      $region20: #{value_net_forward.5} parent=11 // pred_fallthru
        _
      // Predicated region
      $region21: #{value_net_forward.5} parent=11 // pred_check
        %p146 = pneg %p99
      $region22: #{value_net_forward.5} parent=11 // pred_check_branch
        %148 = sbr.rel (%p146) target = $region24
      $region23: #{value_net_forward.5} parent=11 // pred_region
        _
      $region24: #{value_net_forward.5} parent=11 // pred_fallthru
        _
    $region12: #{value_net_forward.5} parent=5 // pred_fallthru
      _
    %p149 = scmp.lt.s32.totalorder %s10, 2
    // Predicated region
    $region25: #{value_net_forward.5} parent=5 // pred_check
      %p150 = pneg %p149
    $region26: #{value_net_forward.5} parent=5 // pred_check_branch
      %152 = sbr.rel (%p150) target = $region28
    $region27: #{value_net_forward.5} parent=5 // pred_region
      // Predicated region
      $region29: #{value_net_forward.5} parent=27 // pred_check
        %p153 = pneg %p30
      $region30: #{value_net_forward.5} parent=27 // pred_check_branch
        %155 = sbr.rel (%p153) target = $region32
      $region31: #{value_net_forward.5} parent=27 // pred_region
        %s156 = smul.u32 8, %s10
        %p157 = scmp.lt.s32.totalorder %s156, 15
        %s158 = scalar_select %p157, %s156, 15
        %s159 = smul.addr %s158, 8
        %s160 = scalar_lea.vmem %s0, %s159
        %s161 = smul.u32 8, %s10
      $region32: #{value_net_forward.5} parent=27 // pred_fallthru
        _
    $region28: #{value_net_forward.5} parent=5 // pred_fallthru
      _
    %p162 = scmp.le.s32.totalorder 1, %s10
    %p163 = scmp.lt.s32.totalorder %s10, 3
    %p164 = pnand %p162, %p163
    %p165 = pneg %p164
    // Predicated region
    $region33: #{value_net_forward.5} parent=5 // pred_check
      _
    $region34: #{value_net_forward.5} parent=5 // pred_check_branch
      %167 = sbr.rel (%p164) target = $region36
    $region35: #{value_net_forward.5} parent=5 // pred_region
      %s168 = ssub.s32 %s10, 1
      %s169 = smul.u32 8, %s15
      %p170 = scmp.lt.s32.totalorder %s169, 15
      %s171 = scalar_select %p170, %s169, 15
      %s172 = smul.addr %s171, 8
      %s173 = scalar_lea.vmem %s0, %s172
      %p174 = pneg %p36
      %p175 = pneg %p33
      %p176 = pneg %p57
      %p177 = pneg %p54
      %p178 = pneg %p78
      %p179 = pneg %p75
      %p180 = pneg %p99
      %p181 = pneg %p96
      %p182 = pneg %p125
      %p183 = pneg %p122
      %s184 = smul.u32 8, %s15
      %p185 = scmp.lt.s32.totalorder %s184, 15
      %s186 = scalar_select %p185, %s184, 15
      %s187 = smul.addr %s186, 8
      %s188 = scalar_lea.vmem %s4, %s187
      %s189 = smul.u32 8, %s15
      %p190 = scmp.lt.s32.totalorder %s189, 15
      %s191 = scalar_select %p190, %s189, 15
      %s192 = smul.addr %s191, 8
      %s193 = scalar_lea.vmem %s0, %s192
      %s194 = smul.u32 8, %s15
      %s195 = smul.u32 8, %s15
      %p196 = scmp.lt.s32.totalorder %s195, 15
      %s197 = scalar_select %p196, %s195, 15
      %s198 = smul.addr %s197, 8
      %s199 = scalar_lea.vmem %s4, %s198
      %s200 = smul.u32 8, %s15
      %v201 = vld [vmem:[%s193] sm:$0xff]
      %v202 = vld [vmem:[%s193 + $0x8] sm:$0xff]
      %v203 = vld [vmem:[%s193 + $0x10] sm:$0xff]
      %v204 = vld [vmem:[%s193 + $0x18] sm:$0xff]
      %v205 = vld [vmem:[%s193 + $0x20] sm:$0xff]
      %v206 = vld [vmem:[%s193 + $0x28] sm:$0xff]
      %v207 = vld [vmem:[%s193 + $0x30] sm:$0xff]
      %v208 = vld [vmem:[%s193 + $0x38] sm:$0xff]
      %v209 = vld [vmem:[%s1] sm:$0xff]
      %v210 = vld [vmem:[%s1 + $0x8] sm:$0xff]
      %v211 = vld [vmem:[%s1 + $0x10] sm:$0xff]
      %v212 = vld [vmem:[%s1 + $0x18] sm:$0xff]
      %v213 = vld [vmem:[%s1 + $0x20] sm:$0xff]
      %v214 = vld [vmem:[%s1 + $0x28] sm:$0xff]
      %v215 = vld [vmem:[%s1 + $0x30] sm:$0xff]
      %v216 = vld [vmem:[%s1 + $0x38] sm:$0xff]
      %v217 = vld [vmem:[%s1 + $0x40] sm:$0xff]
      %v218 = vld [vmem:[%s1 + $0x48] sm:$0xff]
      %v219 = vld [vmem:[%s1 + $0x50] sm:$0xff]
      %v220 = vld [vmem:[%s1 + $0x58] sm:$0xff]
      %v221 = vld [vmem:[%s1 + $0x60] sm:$0xff]
      %v222 = vld [vmem:[%s1 + $0x68] sm:$0xff]
      %v223 = vld [vmem:[%s1 + $0x70] sm:$0xff]
      %v224 = vld [vmem:[%s1 + $0x78] sm:$0xff]
      %225 = vmatprep.subr.mxu0 0.0
      %226 = vmatpush1.msra.mxu0 %v209
      %227 = vmatprep.subr.mxu0 0.0
      %228 = vmatpush1.msra.mxu0 %v210
      %229 = vmatprep.subr.mxu0 0.0
      %230 = vmatpush1.msra.mxu0 %v211
      %231 = vmatprep.subr.mxu0 0.0
      %232 = vmatpush1.msra.mxu0 %v212
      %233 = vmatprep.subr.mxu0 0.0
      %234 = vmatpush1.msra.mxu0 %v213
      %235 = vmatprep.subr.mxu0 0.0
      %236 = vmatpush1.msra.mxu0 %v214
      %237 = vmatprep.subr.mxu0 0.0
      %238 = vmatpush1.msra.mxu0 %v215
      %239 = vmatprep.subr.mxu0 0.0
      %240 = vmatpush1.msra.mxu0 %v216
      %241 = vmatprep.subr.mxu0 0.0
      %242 = vmatpush1.msra.mxu0 %v217
      %243 = vmatprep.subr.mxu0 0.0
      %244 = vmatpush1.msra.mxu0 %v218
      %245 = vmatprep.subr.mxu0 0.0
      %246 = vmatpush1.msra.mxu0 %v219
      %247 = vmatprep.subr.mxu0 0.0
      %248 = vmatpush1.msra.mxu0 %v220
      %249 = vmatprep.subr.mxu0 0.0
      %250 = vmatpush1.msra.mxu0 %v221
      %251 = vmatprep.subr.mxu0 0.0
      %252 = vmatpush1.msra.mxu0 %v222
      %253 = vmatprep.subr.mxu0 0.0
      %254 = vmatpush1.msra.mxu0 %v223
      %255 = vmatprep.subr.mxu0 0.0
      %256 = vmatpush1.msra.mxu0 %v224
      %257 = vmatprep.subr.mxu0 0.0
      %258 = vmatpush1.msra.mxu0 0.0
      %259 = vmatprep.subr.mxu0 0.0
      %260 = vmatpush1.msra.mxu0 0.0
      %261 = vmatprep.subr.mxu0 0.0
      %262 = vmatpush1.msra.mxu0 0.0
      %263 = vmatprep.subr.mxu0 0.0
      %264 = vmatpush1.msra.mxu0 0.0
      %265 = vmatprep.subr.mxu0 0.0
      %266 = vmatpush1.msra.mxu0 0.0
      %267 = vmatprep.subr.mxu0 0.0
      %268 = vmatpush1.msra.mxu0 0.0
      %269 = vmatprep.subr.mxu0 0.0
      %270 = vmatpush1.msra.mxu0 0.0
      %271 = vmatprep.subr.mxu0 0.0
      %272 = vmatpush1.msra.mxu0 0.0
      %273 = vmatprep.subr.mxu0 0.0
      %274 = vmatpush1.msra.mxu0 0.0
      %275 = vmatprep.subr.mxu0 0.0
      %276 = vmatpush1.msra.mxu0 0.0
      %277 = vmatprep.subr.mxu0 0.0
      %278 = vmatpush1.msra.mxu0 0.0
      %279 = vmatprep.subr.mxu0 0.0
      %280 = vmatpush1.msra.mxu0 0.0
      %281 = vmatprep.subr.mxu0 0.0
      %282 = vmatpush1.msra.mxu0 0.0
      %283 = vmatprep.subr.mxu0 0.0
      %284 = vmatpush1.msra.mxu0 0.0
      %285 = vmatprep.subr.mxu0 0.0
      %286 = vmatpush1.msra.mxu0 0.0
      %287 = vmatprep.subr.mxu0 0.0
      %288 = vmatpush1.msra.mxu0 0.0
      %289 = vmatprep.mubr.f32.mxu0 0.0
      %290 = vmatmul.mubr.f32.gmra.mrb[0].mxu0 %v201
      %v291 = vpop.f32.mrb[0].mxu0
      %v292 = vadd.f32 0.0, %v291
      %v293 = vpop.f32.mrb[0].mxu0
      %294 = vmatprep.mubr.f32.mxu0 0.0
      %295 = vmatmul.mubr.f32.gmra.mrb[0].mxu0 %v202
      %v296 = vpop.f32.mrb[0].mxu0
      %v297 = vadd.f32 0.0, %v296
      %v298 = vpop.f32.mrb[0].mxu0
      %299 = vmatprep.mubr.f32.mxu0 0.0
      %300 = vmatmul.mubr.f32.gmra.mrb[0].mxu0 %v203
      %v301 = vpop.f32.mrb[0].mxu0
      %v302 = vadd.f32 0.0, %v301
      %v303 = vpop.f32.mrb[0].mxu0
      %304 = vmatprep.mubr.f32.mxu0 0.0
      %305 = vmatmul.mubr.f32.gmra.mrb[0].mxu0 %v204
      %v306 = vpop.f32.mrb[0].mxu0
      %v307 = vadd.f32 0.0, %v306
      %v308 = vpop.f32.mrb[0].mxu0
      %309 = vmatprep.mubr.f32.mxu0 0.0
      %310 = vmatmul.mubr.f32.gmra.mrb[0].mxu0 %v205
      %v311 = vpop.f32.mrb[0].mxu0
      %v312 = vadd.f32 0.0, %v311
      %v313 = vpop.f32.mrb[0].mxu0
      %314 = vmatprep.mubr.f32.mxu0 0.0
      %315 = vmatmul.mubr.f32.gmra.mrb[0].mxu0 %v206
      %v316 = vpop.f32.mrb[0].mxu0
      %v317 = vadd.f32 0.0, %v316
      %v318 = vpop.f32.mrb[0].mxu0
      %319 = vmatprep.mubr.f32.mxu0 0.0
      %320 = vmatmul.mubr.f32.gmra.mrb[0].mxu0 %v207
      %v321 = vpop.f32.mrb[0].mxu0
      %v322 = vadd.f32 0.0, %v321
      %v323 = vpop.f32.mrb[0].mxu0
      %324 = vmatprep.mubr.f32.mxu0 0.0
      %325 = vmatmul.mubr.f32.gmra.mrb[0].mxu0 %v208
      %v326 = vpop.f32.mrb[0].mxu0
      %v327 = vadd.f32 0.0, %v326
      %v328 = vpop.f32.mrb[0].mxu0
      %329 = vdwg.mxu0
      %v330 = vld [vmem:[%s2] sm:$0xff]
      %v331 = vld [vmem:[%s3] sm:$0x1]
      %v333 = vlaneseq
      %v334 = vshrl.u32 %v333, 7
      %v335 = vsub.s32 0, %v334
      %v336 = vrot.slane %v331, %v335
      %vm338 = vcmask 64512
      %v340 = vsel %vm338, %v292, 0
      %v343 = vsel %vm338, %v297, 0
      %v346 = vsel %vm338, %v302, 0
      %v349 = vsel %vm338, %v307, 0
      %v352 = vsel %vm338, %v312, 0
      %v355 = vsel %vm338, %v317, 0
      %v358 = vsel %vm338, %v322, 0
      %v361 = vsel %vm338, %v327, 0
      %363 = vmatprep.subr.mxu0 0.0
      %364 = vmatpush1.msra.mxu0 %v330
      %365 = vmatprep.subr.mxu0 0.0
      %366 = vmatpush1.msra.mxu0 0.0
      %367 = vmatprep.subr.mxu0 0.0
      %368 = vmatpush1.msra.mxu0 0.0
      %369 = vmatprep.subr.mxu0 0.0
      %370 = vmatpush1.msra.mxu0 0.0
      %371 = vmatprep.subr.mxu0 0.0
      %372 = vmatpush1.msra.mxu0 0.0
      %373 = vmatprep.subr.mxu0 0.0
      %374 = vmatpush1.msra.mxu0 0.0
      %375 = vmatprep.subr.mxu0 0.0
      %376 = vmatpush1.msra.mxu0 0.0
      %377 = vmatprep.subr.mxu0 0.0
      %378 = vmatpush1.msra.mxu0 0.0
      %379 = vmatprep.subr.mxu0 0.0
      %380 = vmatpush1.msra.mxu0 0.0
      %381 = vmatprep.subr.mxu0 0.0
      %382 = vmatpush1.msra.mxu0 0.0
      %383 = vmatprep.subr.mxu0 0.0
      %384 = vmatpush1.msra.mxu0 0.0
      %385 = vmatprep.subr.mxu0 0.0
      %386 = vmatpush1.msra.mxu0 0.0
      %387 = vmatprep.subr.mxu0 0.0
      %388 = vmatpush1.msra.mxu0 0.0
      %389 = vmatprep.subr.mxu0 0.0
      %390 = vmatpush1.msra.mxu0 0.0
      %391 = vmatprep.subr.mxu0 0.0
      %392 = vmatpush1.msra.mxu0 0.0
      %393 = vmatprep.subr.mxu0 0.0
      %394 = vmatpush1.msra.mxu0 0.0
      %395 = vmatprep.subr.mxu0 0.0
      %396 = vmatpush1.msra.mxu0 0.0
      %397 = vmatprep.subr.mxu0 0.0
      %398 = vmatpush1.msra.mxu0 0.0
      %399 = vmatprep.subr.mxu0 0.0
      %400 = vmatpush1.msra.mxu0 0.0
      %401 = vmatprep.subr.mxu0 0.0
      %402 = vmatpush1.msra.mxu0 0.0
      %403 = vmatprep.subr.mxu0 0.0
      %404 = vmatpush1.msra.mxu0 0.0
      %405 = vmatprep.subr.mxu0 0.0
      %406 = vmatpush1.msra.mxu0 0.0
      %407 = vmatprep.subr.mxu0 0.0
      %408 = vmatpush1.msra.mxu0 0.0
      %409 = vmatprep.subr.mxu0 0.0
      %410 = vmatpush1.msra.mxu0 0.0
      %411 = vmatprep.subr.mxu0 0.0
      %412 = vmatpush1.msra.mxu0 0.0
      %413 = vmatprep.subr.mxu0 0.0
      %414 = vmatpush1.msra.mxu0 0.0
      %415 = vmatprep.subr.mxu0 0.0
      %416 = vmatpush1.msra.mxu0 0.0
      %417 = vmatprep.subr.mxu0 0.0
      %418 = vmatpush1.msra.mxu0 0.0
      %419 = vmatprep.subr.mxu0 0.0
      %420 = vmatpush1.msra.mxu0 0.0
      %421 = vmatprep.subr.mxu0 0.0
      %422 = vmatpush1.msra.mxu0 0.0
      %423 = vmatprep.subr.mxu0 0.0
      %424 = vmatpush1.msra.mxu0 0.0
      %425 = vmatprep.subr.mxu0 0.0
      %426 = vmatpush1.msra.mxu0 0.0
      %427 = vmatprep.mubr.f32.mxu0 0.0
      %428 = vmatmul.mubr.f32.gmra.mrb[0].mxu0 %v340
      %v429 = vpop.f32.mrb[0].mxu0
      %v430 = vadd.f32 %v336, %v429
      %v431 = vpop.f32.mrb[0].mxu0
      %432 = vmatprep.mubr.f32.mxu0 0.0
      %433 = vmatmul.mubr.f32.gmra.mrb[0].mxu0 %v343
      %v434 = vpop.f32.mrb[0].mxu0
      %v435 = vadd.f32 %v336, %v434
      %v436 = vpop.f32.mrb[0].mxu0
      %437 = vmatprep.mubr.f32.mxu0 0.0
      %438 = vmatmul.mubr.f32.gmra.mrb[0].mxu0 %v346
      %v439 = vpop.f32.mrb[0].mxu0
      %v440 = vadd.f32 %v336, %v439
      %v441 = vpop.f32.mrb[0].mxu0
      %442 = vmatprep.mubr.f32.mxu0 0.0
      %443 = vmatmul.mubr.f32.gmra.mrb[0].mxu0 %v349
      %v444 = vpop.f32.mrb[0].mxu0
      %v445 = vadd.f32 %v336, %v444
      %v446 = vpop.f32.mrb[0].mxu0
      %447 = vmatprep.mubr.f32.mxu0 0.0
      %448 = vmatmul.mubr.f32.gmra.mrb[0].mxu0 %v352
      %v449 = vpop.f32.mrb[0].mxu0
      %v450 = vadd.f32 %v336, %v449
      %v451 = vpop.f32.mrb[0].mxu0
      %452 = vmatprep.mubr.f32.mxu0 0.0
      %453 = vmatmul.mubr.f32.gmra.mrb[0].mxu0 %v355
      %v454 = vpop.f32.mrb[0].mxu0
      %v455 = vadd.f32 %v336, %v454
      %v456 = vpop.f32.mrb[0].mxu0
      %457 = vmatprep.mubr.f32.mxu0 0.0
      %458 = vmatmul.mubr.f32.gmra.mrb[0].mxu0 %v358
      %v459 = vpop.f32.mrb[0].mxu0
      %v460 = vadd.f32 %v336, %v459
      %v461 = vpop.f32.mrb[0].mxu0
      %462 = vmatprep.mubr.f32.mxu0 0.0
      %463 = vmatmul.mubr.f32.gmra.mrb[0].mxu0 %v361
      %v464 = vpop.f32.mrb[0].mxu0
      %v465 = vadd.f32 %v336, %v464
      %v466 = vpop.f32.mrb[0].mxu0
      %467 = vdwg.mxu0
      %vm468 = vcmask 261120
      %469 = vst.msk [vmem:[%s199] sm:$0xff] %vm468, %v430
      %470 = vst.msk [vmem:[%s199 + $0x8] sm:$0xff] %vm468, %v435
      %471 = vst.msk [vmem:[%s199 + $0x10] sm:$0xff] %vm468, %v440
      %472 = vst.msk [vmem:[%s199 + $0x18] sm:$0xff] %vm468, %v445
      %473 = vst.msk [vmem:[%s199 + $0x20] sm:$0xff] %vm468, %v450
      %474 = vst.msk [vmem:[%s199 + $0x28] sm:$0xff] %vm468, %v455
      %475 = vst.msk [vmem:[%s199 + $0x30] sm:$0xff] %vm468, %v460
      %476 = vst.msk [vmem:[%s199 + $0x38] sm:$0xff] %vm468, %v465
      %s477 = smul.u32 8, %s15
      %p478 = scmp.lt.s32.totalorder %s477, 15
      %s479 = scalar_select %p478, %s477, 15
      %s480 = smul.addr %s479, 8
      %s481 = scalar_lea.vmem %s4, %s480
      // Predicated region
      $region37: #{value_net_forward.5} parent=35 // pred_check
        %p482 = pneg %p122
      $region38: #{value_net_forward.5} parent=35 // pred_check_branch
        %484 = sbr.rel (%p482) target = $region40
      $region39: #{value_net_forward.5} parent=35 // pred_region
        %s485 = smul.u32 8, %s15
      $region40: #{value_net_forward.5} parent=35 // pred_fallthru
        _
    $region36: #{value_net_forward.5} parent=5 // pred_fallthru
      _
    %p486 = scmp.le.s32.totalorder 2, %s10
    // Predicated region
    $region41: #{value_net_forward.5} parent=5 // pred_check
      %p487 = pneg %p486
    $region42: #{value_net_forward.5} parent=5 // pred_check_branch
      %489 = sbr.rel (%p487) target = $region44
    $region43: #{value_net_forward.5} parent=5 // pred_region
      %s490 = ssub.s32 %s10, 2
      // Predicated region
      $region45: #{value_net_forward.5} parent=43 // pred_check
        %p491 = pneg %p128
      $region46: #{value_net_forward.5} parent=43 // pred_check_branch
        %493 = sbr.rel (%p491) target = $region48
      $region47: #{value_net_forward.5} parent=43 // pred_region
        %s494 = smul.u32 8, %s16
        %p495 = scmp.lt.s32.totalorder %s494, 15
        %s496 = scalar_select %p495, %s494, 15
        %s497 = smul.addr %s496, 8
        %s498 = scalar_lea.vmem %s4, %s497
      $region48: #{value_net_forward.5} parent=43 // pred_fallthru
        _
    $region44: #{value_net_forward.5} parent=5 // pred_fallthru
      _
  $region6: #{value_net_forward.5} parent=0 // loop_footer
    %s14 = sadd.s32 1, %s10
  $region7: #{value_net_forward.5} parent=0 // loop_footer_branch
    %9 = sbr.rel target = $region3
  $region8: #{value_net_forward.5} parent=0 // loop_exit
    _

// kernel: value_net_forward.4
$region0: #{value_net_forward.4}
  #allocation0 [shape = 'u32[]', space=smem, size = 0x4, offset = 0x4, fixed_abs, tag = 'smem constant byte address 0x4 - core index']
  #allocation1 [shape = 'u32[144,128]{1,0:T(1,128)}', space=vmem, size = 0x12000, scoped, tag = 'internal scratch']
  %s0 = inlined_call_operand.vmem [shape: f32[128,128], index: 0, kind: input, shape index: {}]
  %s1 = inlined_call_operand.vmem [shape: f32[128,8], index: 1, kind: input, shape index: {}]
  %s2 = inlined_call_operand.vmem [shape: f32[8,8], index: 2, kind: input, shape index: {}]
  %s3 = inlined_call_operand.vmem [shape: f32[1,8], index: 3, kind: input, shape index: {}]
  %s4 = inlined_call_operand.vmem [shape: f32[128,8], index: 4, kind: output, shape index: {}]
  %s5 = sld [smem:[#allocation0]]
  $region49: #{value_net_forward.4} parent=0
    _
  %s7 = ssub.s32 1, %s5
  %s8 = scalar_select 0, %s7, %s5
  loop: start=0, step=1, limit=4
  $region2: #{value_net_forward.4} parent=0 // loop_pre_header
    _
  $region3: #{value_net_forward.4} parent=0 // loop_header
    %s10 = sphi 0, %s14
    %p11 = scmp.ge.s32.totalorder %s10, 4
    %s20 = sphi 0, %s22
    %s23 = sphi 0, %s20
    %s24 = sphi 0, %s23
    %s40 = sphi 0, %s24
    %s44 = sphi 0, %s44
    %s46 = sphi 0, %s44
    %s47 = sphi 0, %s46
    %s61 = sphi 0, %s47
    %s65 = sphi 0, %s65
    %s67 = sphi 0, %s65
    %s68 = sphi 0, %s67
    %s82 = sphi 0, %s68
    %s86 = sphi 0, %s86
    %s88 = sphi 0, %s86
    %s89 = sphi 0, %s88
    %s103 = sphi 0, %s89
    %s109 = sphi 0, %s111
    %s112 = sphi 0, %s109
    %s113 = sphi 0, %s112
    %s129 = sphi 0, %s113
  $region4: #{value_net_forward.4} parent=0 // loop_header_branch
    %13 = sbr.rel (%p11) target = $region8
  $region5: #{value_net_forward.4} parent=0 // loop_body
    %s15 = ssub.s32 %s10, 1
    %s16 = ssub.s32 %s10, 2
    %s17 = sadd.s32 %s10, 1
    %s18 = ssub.s32 %s10, %s17
    %p19 = scmp.eq.s32.totalorder %s18, 0
    %s21 = sadd.s32 %s20, 1
    %s22 = scalar_select %p19, %s20, %s21
    %p25 = pneg %p19
    %p26 = scmp.eq.s32.totalorder %s10, 1
    %p27 = por %p25, %p26
    %p28 = scmp.ne.s32.totalorder %s20, %s23
    %p29 = scmp.eq.s32.totalorder %s10, 0
    %p30 = por %p28, %p29
    %p31 = scmp.ne.s32.totalorder %s20, %s23
    %p32 = scmp.eq.s32.totalorder %s15, 1
    %p33 = por %p31, %p32
    %p34 = scmp.ne.s32.totalorder %s23, %s24
    %p35 = scmp.eq.s32.totalorder %s15, 0
    %p36 = por %p34, %p35
    %p37 = scmp.ne.s32.totalorder %s23, %s24
    %p38 = scmp.eq.s32.totalorder %s16, 1
    %p39 = por %p37, %p38
    %p41 = scmp.ne.s32.totalorder %s24, %s40
    %p42 = scmp.eq.s32.totalorder %s16, 0
    %p43 = por %p41, %p42
    %s45 = sadd.s32 %s44, 1
    %p48 = scmp.eq.s32.totalorder %s10, 1
    %p49 = scmp.ne.s32.totalorder %s44, %s46
    %p50 = scmp.eq.s32.totalorder %s10, 0
    %p51 = por %p49, %p50
    %p52 = scmp.ne.s32.totalorder %s44, %s46
    %p53 = scmp.eq.s32.totalorder %s15, 1
    %p54 = por %p52, %p53
    %p55 = scmp.ne.s32.totalorder %s46, %s47
    %p56 = scmp.eq.s32.totalorder %s15, 0
    %p57 = por %p55, %p56
    %p58 = scmp.ne.s32.totalorder %s46, %s47
    %p59 = scmp.eq.s32.totalorder %s16, 1
    %p60 = por %p58, %p59
    %p62 = scmp.ne.s32.totalorder %s47, %s61
    %p63 = scmp.eq.s32.totalorder %s16, 0
    %p64 = por %p62, %p63
    %s66 = sadd.s32 %s65, 1
    %p69 = scmp.eq.s32.totalorder %s10, 1
    %p70 = scmp.ne.s32.totalorder %s65, %s67
    %p71 = scmp.eq.s32.totalorder %s10, 0
    %p72 = por %p70, %p71
    %p73 = scmp.ne.s32.totalorder %s65, %s67
    %p74 = scmp.eq.s32.totalorder %s15, 1
    %p75 = por %p73, %p74
    %p76 = scmp.ne.s32.totalorder %s67, %s68
    %p77 = scmp.eq.s32.totalorder %s15, 0
    %p78 = por %p76, %p77
    %p79 = scmp.ne.s32.totalorder %s67, %s68
    %p80 = scmp.eq.s32.totalorder %s16, 1
    %p81 = por %p79, %p80
    %p83 = scmp.ne.s32.totalorder %s68, %s82
    %p84 = scmp.eq.s32.totalorder %s16, 0
    %p85 = por %p83, %p84
    %s87 = sadd.s32 %s86, 1
    %p90 = scmp.eq.s32.totalorder %s10, 1
    %p91 = scmp.ne.s32.totalorder %s86, %s88
    %p92 = scmp.eq.s32.totalorder %s10, 0
    %p93 = por %p91, %p92
    %p94 = scmp.ne.s32.totalorder %s86, %s88
    %p95 = scmp.eq.s32.totalorder %s15, 1
    %p96 = por %p94, %p95
    %p97 = scmp.ne.s32.totalorder %s88, %s89
    %p98 = scmp.eq.s32.totalorder %s15, 0
    %p99 = por %p97, %p98
    %p100 = scmp.ne.s32.totalorder %s88, %s89
    %p101 = scmp.eq.s32.totalorder %s16, 1
    %p102 = por %p100, %p101
    %p104 = scmp.ne.s32.totalorder %s89, %s103
    %p105 = scmp.eq.s32.totalorder %s16, 0
    %p106 = por %p104, %p105
    %s107 = ssub.s32 %s10, %s17
    %p108 = scmp.eq.s32.totalorder %s107, 0
    %s110 = sadd.s32 %s109, 1
    %s111 = scalar_select %p108, %s109, %s110
    %p114 = pneg %p108
    %p115 = scmp.eq.s32.totalorder %s10, 1
    %p116 = por %p114, %p115
    %p117 = scmp.ne.s32.totalorder %s109, %s112
    %p118 = scmp.eq.s32.totalorder %s10, 0
    %p119 = por %p117, %p118
    %p120 = scmp.ne.s32.totalorder %s109, %s112
    %p121 = scmp.eq.s32.totalorder %s15, 1
    %p122 = por %p120, %p121
    %p123 = scmp.ne.s32.totalorder %s112, %s113
    %p124 = scmp.eq.s32.totalorder %s15, 0
    %p125 = por %p123, %p124
    %p126 = scmp.ne.s32.totalorder %s112, %s113
    %p127 = scmp.eq.s32.totalorder %s16, 1
    %p128 = por %p126, %p127
    %p130 = scmp.ne.s32.totalorder %s113, %s129
    %p131 = scmp.eq.s32.totalorder %s16, 0
    %p132 = por %p130, %p131
    %p133 = scmp.le.s32.totalorder 1, %s10
    %p134 = scmp.lt.s32.totalorder %s10, 3
    %p135 = pnand %p133, %p134
    %p136 = pneg %p135
    // Predicated region
    $region9: #{value_net_forward.4} parent=5 // pred_check
      _
    $region10: #{value_net_forward.4} parent=5 // pred_check_branch
      %138 = sbr.rel (%p135) target = $region12
    $region11: #{value_net_forward.4} parent=5 // pred_region
      %s139 = ssub.s32 %s10, 1
      // Predicated region
      $region13: #{value_net_forward.4} parent=11 // pred_check
        %p140 = pneg %p57
      $region14: #{value_net_forward.4} parent=11 // pred_check_branch
        %142 = sbr.rel (%p140) target = $region16
      $region15: #{value_net_forward.4} parent=11 // pred_region
        _
      $region16: #{value_net_forward.4} parent=11 // pred_fallthru
        _
      // Predicated region
      $region17: #{value_net_forward.4} parent=11 // pred_check
        %p143 = pneg %p78
      $region18: #{value_net_forward.4} parent=11 // pred_check_branch
        %145 = sbr.rel (%p143) target = $region20
      $region19: #{value_net_forward.4} parent=11 // pred_region
        _
      $region20: #{value_net_forward.4} parent=11 // pred_fallthru
        _
      // Predicated region
      $region21: #{value_net_forward.4} parent=11 // pred_check
        %p146 = pneg %p99
      $region22: #{value_net_forward.4} parent=11 // pred_check_branch
        %148 = sbr.rel (%p146) target = $region24
      $region23: #{value_net_forward.4} parent=11 // pred_region
        _
      $region24: #{value_net_forward.4} parent=11 // pred_fallthru
        _
    $region12: #{value_net_forward.4} parent=5 // pred_fallthru
      _
    %p149 = scmp.lt.s32.totalorder %s10, 2
    // Predicated region
    $region25: #{value_net_forward.4} parent=5 // pred_check
      %p150 = pneg %p149
    $region26: #{value_net_forward.4} parent=5 // pred_check_branch
      %152 = sbr.rel (%p150) target = $region28
    $region27: #{value_net_forward.4} parent=5 // pred_region
      // Predicated region
      $region29: #{value_net_forward.4} parent=27 // pred_check
        %p153 = pneg %p30
      $region30: #{value_net_forward.4} parent=27 // pred_check_branch
        %155 = sbr.rel (%p153) target = $region32
      $region31: #{value_net_forward.4} parent=27 // pred_region
        %s156 = smul.u32 8, %s10
        %p157 = scmp.lt.s32.totalorder %s156, 15
        %s158 = scalar_select %p157, %s156, 15
        %s159 = smul.addr %s158, 8
        %s160 = scalar_lea.vmem %s0, %s159
        %s161 = smul.u32 8, %s10
      $region32: #{value_net_forward.4} parent=27 // pred_fallthru
        _
    $region28: #{value_net_forward.4} parent=5 // pred_fallthru
      _
    %p162 = scmp.le.s32.totalorder 1, %s10
    %p163 = scmp.lt.s32.totalorder %s10, 3
    %p164 = pnand %p162, %p163
    %p165 = pneg %p164
    // Predicated region
    $region33: #{value_net_forward.4} parent=5 // pred_check
      _
    $region34: #{value_net_forward.4} parent=5 // pred_check_branch
      %167 = sbr.rel (%p164) target = $region36
    $region35: #{value_net_forward.4} parent=5 // pred_region
      %s168 = ssub.s32 %s10, 1
      %s169 = smul.u32 8, %s15
      %p170 = scmp.lt.s32.totalorder %s169, 15
      %s171 = scalar_select %p170, %s169, 15
      %s172 = smul.addr %s171, 8
      %s173 = scalar_lea.vmem %s0, %s172
      %p174 = pneg %p36
      %p175 = pneg %p33
      %p176 = pneg %p57
      %p177 = pneg %p54
      %p178 = pneg %p78
      %p179 = pneg %p75
      %p180 = pneg %p99
      %p181 = pneg %p96
      %p182 = pneg %p125
      %p183 = pneg %p122
      %s184 = smul.u32 8, %s15
      %p185 = scmp.lt.s32.totalorder %s184, 15
      %s186 = scalar_select %p185, %s184, 15
      %s187 = smul.addr %s186, 8
      %s188 = scalar_lea.vmem %s4, %s187
      %s189 = smul.u32 8, %s15
      %p190 = scmp.lt.s32.totalorder %s189, 15
      %s191 = scalar_select %p190, %s189, 15
      %s192 = smul.addr %s191, 8
      %s193 = scalar_lea.vmem %s0, %s192
      %s194 = smul.u32 8, %s15
      %s195 = smul.u32 8, %s15
      %p196 = scmp.lt.s32.totalorder %s195, 15
      %s197 = scalar_select %p196, %s195, 15
      %s198 = smul.addr %s197, 8
      %s199 = scalar_lea.vmem %s4, %s198
      %s200 = smul.u32 8, %s15
      %v201 = vld [vmem:[%s193] sm:$0xff]
      %v202 = vld [vmem:[%s193 + $0x8] sm:$0xff]
      %v203 = vld [vmem:[%s193 + $0x10] sm:$0xff]
      %v204 = vld [vmem:[%s193 + $0x18] sm:$0xff]
      %v205 = vld [vmem:[%s193 + $0x20] sm:$0xff]
      %v206 = vld [vmem:[%s193 + $0x28] sm:$0xff]
      %v207 = vld [vmem:[%s193 + $0x30] sm:$0xff]
      %v208 = vld [vmem:[%s193 + $0x38] sm:$0xff]
      %v209 = vld [vmem:[%s1] sm:$0xff]
      %v210 = vld [vmem:[%s1 + $0x8] sm:$0xff]
      %v211 = vld [vmem:[%s1 + $0x10] sm:$0xff]
      %v212 = vld [vmem:[%s1 + $0x18] sm:$0xff]
      %v213 = vld [vmem:[%s1 + $0x20] sm:$0xff]
      %v214 = vld [vmem:[%s1 + $0x28] sm:$0xff]
      %v215 = vld [vmem:[%s1 + $0x30] sm:$0xff]
      %v216 = vld [vmem:[%s1 + $0x38] sm:$0xff]
      %v217 = vld [vmem:[%s1 + $0x40] sm:$0xff]
      %v218 = vld [vmem:[%s1 + $0x48] sm:$0xff]
      %v219 = vld [vmem:[%s1 + $0x50] sm:$0xff]
      %v220 = vld [vmem:[%s1 + $0x58] sm:$0xff]
      %v221 = vld [vmem:[%s1 + $0x60] sm:$0xff]
      %v222 = vld [vmem:[%s1 + $0x68] sm:$0xff]
      %v223 = vld [vmem:[%s1 + $0x70] sm:$0xff]
      %v224 = vld [vmem:[%s1 + $0x78] sm:$0xff]
      %225 = vmatprep.subr.mxu0 0.0
      %226 = vmatpush1.msra.mxu0 %v209
      %227 = vmatprep.subr.mxu0 0.0
      %228 = vmatpush1.msra.mxu0 %v210
      %229 = vmatprep.subr.mxu0 0.0
      %230 = vmatpush1.msra.mxu0 %v211
      %231 = vmatprep.subr.mxu0 0.0
      %232 = vmatpush1.msra.mxu0 %v212
      %233 = vmatprep.subr.mxu0 0.0
      %234 = vmatpush1.msra.mxu0 %v213
      %235 = vmatprep.subr.mxu0 0.0
      %236 = vmatpush1.msra.mxu0 %v214
      %237 = vmatprep.subr.mxu0 0.0
      %238 = vmatpush1.msra.mxu0 %v215
      %239 = vmatprep.subr.mxu0 0.0
      %240 = vmatpush1.msra.mxu0 %v216
      %241 = vmatprep.subr.mxu0 0.0
      %242 = vmatpush1.msra.mxu0 %v217
      %243 = vmatprep.subr.mxu0 0.0
      %244 = vmatpush1.msra.mxu0 %v218
      %245 = vmatprep.subr.mxu0 0.0
      %246 = vmatpush1.msra.mxu0 %v219
      %247 = vmatprep.subr.mxu0 0.0
      %248 = vmatpush1.msra.mxu0 %v220
      %249 = vmatprep.subr.mxu0 0.0
      %250 = vmatpush1.msra.mxu0 %v221
      %251 = vmatprep.subr.mxu0 0.0
      %252 = vmatpush1.msra.mxu0 %v222
      %253 = vmatprep.subr.mxu0 0.0
      %254 = vmatpush1.msra.mxu0 %v223
      %255 = vmatprep.subr.mxu0 0.0
      %256 = vmatpush1.msra.mxu0 %v224
      %257 = vmatprep.subr.mxu0 0.0
      %258 = vmatpush1.msra.mxu0 0.0
      %259 = vmatprep.subr.mxu0 0.0
      %260 = vmatpush1.msra.mxu0 0.0
      %261 = vmatprep.subr.mxu0 0.0
      %262 = vmatpush1.msra.mxu0 0.0
      %263 = vmatprep.subr.mxu0 0.0
      %264 = vmatpush1.msra.mxu0 0.0
      %265 = vmatprep.subr.mxu0 0.0
      %266 = vmatpush1.msra.mxu0 0.0
      %267 = vmatprep.subr.mxu0 0.0
      %268 = vmatpush1.msra.mxu0 0.0
      %269 = vmatprep.subr.mxu0 0.0
      %270 = vmatpush1.msra.mxu0 0.0
      %271 = vmatprep.subr.mxu0 0.0
      %272 = vmatpush1.msra.mxu0 0.0
      %273 = vmatprep.subr.mxu0 0.0
      %274 = vmatpush1.msra.mxu0 0.0
      %275 = vmatprep.subr.mxu0 0.0
      %276 = vmatpush1.msra.mxu0 0.0
      %277 = vmatprep.subr.mxu0 0.0
      %278 = vmatpush1.msra.mxu0 0.0
      %279 = vmatprep.subr.mxu0 0.0
      %280 = vmatpush1.msra.mxu0 0.0
      %281 = vmatprep.subr.mxu0 0.0
      %282 = vmatpush1.msra.mxu0 0.0
      %283 = vmatprep.subr.mxu0 0.0
      %284 = vmatpush1.msra.mxu0 0.0
      %285 = vmatprep.subr.mxu0 0.0
      %286 = vmatpush1.msra.mxu0 0.0
      %287 = vmatprep.subr.mxu0 0.0
      %288 = vmatpush1.msra.mxu0 0.0
      %289 = vmatprep.mubr.f32.mxu0 0.0
      %290 = vmatmul.mubr.f32.gmra.mrb[0].mxu0 %v201
      %v291 = vpop.f32.mrb[0].mxu0
      %v292 = vadd.f32 0.0, %v291
      %v293 = vpop.f32.mrb[0].mxu0
      %294 = vmatprep.mubr.f32.mxu0 0.0
      %295 = vmatmul.mubr.f32.gmra.mrb[0].mxu0 %v202
      %v296 = vpop.f32.mrb[0].mxu0
      %v297 = vadd.f32 0.0, %v296
      %v298 = vpop.f32.mrb[0].mxu0
      %299 = vmatprep.mubr.f32.mxu0 0.0
      %300 = vmatmul.mubr.f32.gmra.mrb[0].mxu0 %v203
      %v301 = vpop.f32.mrb[0].mxu0
      %v302 = vadd.f32 0.0, %v301
      %v303 = vpop.f32.mrb[0].mxu0
      %304 = vmatprep.mubr.f32.mxu0 0.0
      %305 = vmatmul.mubr.f32.gmra.mrb[0].mxu0 %v204
      %v306 = vpop.f32.mrb[0].mxu0
      %v307 = vadd.f32 0.0, %v306
      %v308 = vpop.f32.mrb[0].mxu0
      %309 = vmatprep.mubr.f32.mxu0 0.0
      %310 = vmatmul.mubr.f32.gmra.mrb[0].mxu0 %v205
      %v311 = vpop.f32.mrb[0].mxu0
      %v312 = vadd.f32 0.0, %v311
      %v313 = vpop.f32.mrb[0].mxu0
      %314 = vmatprep.mubr.f32.mxu0 0.0
      %315 = vmatmul.mubr.f32.gmra.mrb[0].mxu0 %v206
      %v316 = vpop.f32.mrb[0].mxu0
      %v317 = vadd.f32 0.0, %v316
      %v318 = vpop.f32.mrb[0].mxu0
      %319 = vmatprep.mubr.f32.mxu0 0.0
      %320 = vmatmul.mubr.f32.gmra.mrb[0].mxu0 %v207
      %v321 = vpop.f32.mrb[0].mxu0
      %v322 = vadd.f32 0.0, %v321
      %v323 = vpop.f32.mrb[0].mxu0
      %324 = vmatprep.mubr.f32.mxu0 0.0
      %325 = vmatmul.mubr.f32.gmra.mrb[0].mxu0 %v208
      %v326 = vpop.f32.mrb[0].mxu0
      %v327 = vadd.f32 0.0, %v326
      %v328 = vpop.f32.mrb[0].mxu0
      %329 = vdwg.mxu0
      %v330 = vld [vmem:[%s2] sm:$0xff]
      %v331 = vld [vmem:[%s3] sm:$0x1]
      %v333 = vlaneseq
      %v334 = vshrl.u32 %v333, 7
      %v335 = vsub.s32 0, %v334
      %v336 = vrot.slane %v331, %v335
      %vm338 = vcmask 64512
      %v340 = vsel %vm338, %v292, 0
      %v343 = vsel %vm338, %v297, 0
      %v346 = vsel %vm338, %v302, 0
      %v349 = vsel %vm338, %v307, 0
      %v352 = vsel %vm338, %v312, 0
      %v355 = vsel %vm338, %v317, 0
      %v358 = vsel %vm338, %v322, 0
      %v361 = vsel %vm338, %v327, 0
      %363 = vmatprep.subr.mxu0 0.0
      %364 = vmatpush1.msra.mxu0 %v330
      %365 = vmatprep.subr.mxu0 0.0
      %366 = vmatpush1.msra.mxu0 0.0
      %367 = vmatprep.subr.mxu0 0.0
      %368 = vmatpush1.msra.mxu0 0.0
      %369 = vmatprep.subr.mxu0 0.0
      %370 = vmatpush1.msra.mxu0 0.0
      %371 = vmatprep.subr.mxu0 0.0
      %372 = vmatpush1.msra.mxu0 0.0
      %373 = vmatprep.subr.mxu0 0.0
      %374 = vmatpush1.msra.mxu0 0.0
      %375 = vmatprep.subr.mxu0 0.0
      %376 = vmatpush1.msra.mxu0 0.0
      %377 = vmatprep.subr.mxu0 0.0
      %378 = vmatpush1.msra.mxu0 0.0
      %379 = vmatprep.subr.mxu0 0.0
      %380 = vmatpush1.msra.mxu0 0.0
      %381 = vmatprep.subr.mxu0 0.0
      %382 = vmatpush1.msra.mxu0 0.0
      %383 = vmatprep.subr.mxu0 0.0
      %384 = vmatpush1.msra.mxu0 0.0
      %385 = vmatprep.subr.mxu0 0.0
      %386 = vmatpush1.msra.mxu0 0.0
      %387 = vmatprep.subr.mxu0 0.0
      %388 = vmatpush1.msra.mxu0 0.0
      %389 = vmatprep.subr.mxu0 0.0
      %390 = vmatpush1.msra.mxu0 0.0
      %391 = vmatprep.subr.mxu0 0.0
      %392 = vmatpush1.msra.mxu0 0.0
      %393 = vmatprep.subr.mxu0 0.0
      %394 = vmatpush1.msra.mxu0 0.0
      %395 = vmatprep.subr.mxu0 0.0
      %396 = vmatpush1.msra.mxu0 0.0
      %397 = vmatprep.subr.mxu0 0.0
      %398 = vmatpush1.msra.mxu0 0.0
      %399 = vmatprep.subr.mxu0 0.0
      %400 = vmatpush1.msra.mxu0 0.0
      %401 = vmatprep.subr.mxu0 0.0
      %402 = vmatpush1.msra.mxu0 0.0
      %403 = vmatprep.subr.mxu0 0.0
      %404 = vmatpush1.msra.mxu0 0.0
      %405 = vmatprep.subr.mxu0 0.0
      %406 = vmatpush1.msra.mxu0 0.0
      %407 = vmatprep.subr.mxu0 0.0
      %408 = vmatpush1.msra.mxu0 0.0
      %409 = vmatprep.subr.mxu0 0.0
      %410 = vmatpush1.msra.mxu0 0.0
      %411 = vmatprep.subr.mxu0 0.0
      %412 = vmatpush1.msra.mxu0 0.0
      %413 = vmatprep.subr.mxu0 0.0
      %414 = vmatpush1.msra.mxu0 0.0
      %415 = vmatprep.subr.mxu0 0.0
      %416 = vmatpush1.msra.mxu0 0.0
      %417 = vmatprep.subr.mxu0 0.0
      %418 = vmatpush1.msra.mxu0 0.0
      %419 = vmatprep.subr.mxu0 0.0
      %420 = vmatpush1.msra.mxu0 0.0
      %421 = vmatprep.subr.mxu0 0.0
      %422 = vmatpush1.msra.mxu0 0.0
      %423 = vmatprep.subr.mxu0 0.0
      %424 = vmatpush1.msra.mxu0 0.0
      %425 = vmatprep.subr.mxu0 0.0
      %426 = vmatpush1.msra.mxu0 0.0
      %427 = vmatprep.mubr.f32.mxu0 0.0
      %428 = vmatmul.mubr.f32.gmra.mrb[0].mxu0 %v340
      %v429 = vpop.f32.mrb[0].mxu0
      %v430 = vadd.f32 %v336, %v429
      %v431 = vpop.f32.mrb[0].mxu0
      %432 = vmatprep.mubr.f32.mxu0 0.0
      %433 = vmatmul.mubr.f32.gmra.mrb[0].mxu0 %v343
      %v434 = vpop.f32.mrb[0].mxu0
      %v435 = vadd.f32 %v336, %v434
      %v436 = vpop.f32.mrb[0].mxu0
      %437 = vmatprep.mubr.f32.mxu0 0.0
      %438 = vmatmul.mubr.f32.gmra.mrb[0].mxu0 %v346
      %v439 = vpop.f32.mrb[0].mxu0
      %v440 = vadd.f32 %v336, %v439
      %v441 = vpop.f32.mrb[0].mxu0
      %442 = vmatprep.mubr.f32.mxu0 0.0
      %443 = vmatmul.mubr.f32.gmra.mrb[0].mxu0 %v349
      %v444 = vpop.f32.mrb[0].mxu0
      %v445 = vadd.f32 %v336, %v444
      %v446 = vpop.f32.mrb[0].mxu0
      %447 = vmatprep.mubr.f32.mxu0 0.0
      %448 = vmatmul.mubr.f32.gmra.mrb[0].mxu0 %v352
      %v449 = vpop.f32.mrb[0].mxu0
      %v450 = vadd.f32 %v336, %v449
      %v451 = vpop.f32.mrb[0].mxu0
      %452 = vmatprep.mubr.f32.mxu0 0.0
      %453 = vmatmul.mubr.f32.gmra.mrb[0].mxu0 %v355
      %v454 = vpop.f32.mrb[0].mxu0
      %v455 = vadd.f32 %v336, %v454
      %v456 = vpop.f32.mrb[0].mxu0
      %457 = vmatprep.mubr.f32.mxu0 0.0
      %458 = vmatmul.mubr.f32.gmra.mrb[0].mxu0 %v358
      %v459 = vpop.f32.mrb[0].mxu0
      %v460 = vadd.f32 %v336, %v459
      %v461 = vpop.f32.mrb[0].mxu0
      %462 = vmatprep.mubr.f32.mxu0 0.0
      %463 = vmatmul.mubr.f32.gmra.mrb[0].mxu0 %v361
      %v464 = vpop.f32.mrb[0].mxu0
      %v465 = vadd.f32 %v336, %v464
      %v466 = vpop.f32.mrb[0].mxu0
      %467 = vdwg.mxu0
      %s468 = smul.u32 %s15, 64
      %s469 = scalar_lea.vmem %s1, %s468
      %v470 = vld [vmem:[%s469] sm:$0xff]
      %v471 = vld [vmem:[%s469 + $0x8] sm:$0xff]
      %v472 = vld [vmem:[%s469 + $0x10] sm:$0xff]
      %v473 = vld [vmem:[%s469 + $0x18] sm:$0xff]
      %v474 = vld [vmem:[%s469 + $0x20] sm:$0xff]
      %v475 = vld [vmem:[%s469 + $0x28] sm:$0xff]
      %v476 = vld [vmem:[%s469 + $0x30] sm:$0xff]
      %v477 = vld [vmem:[%s469 + $0x38] sm:$0xff]
      %v478 = vadd.f32 %v430, %v470
      %v479 = vadd.f32 %v435, %v471
      %v480 = vadd.f32 %v440, %v472
      %v481 = vadd.f32 %v445, %v473
      %v482 = vadd.f32 %v450, %v474
      %v483 = vadd.f32 %v455, %v475
      %v484 = vadd.f32 %v460, %v476
      %v485 = vadd.f32 %v465, %v477
      %486 = vst.msk [vmem:[%s199] sm:$0xff] %vm338, %v478
      %487 = vst.msk [vmem:[%s199 + $0x8] sm:$0xff] %vm338, %v479
      %488 = vst.msk [vmem:[%s199 + $0x10] sm:$0xff] %vm338, %v480
      %489 = vst.msk [vmem:[%s199 + $0x18] sm:$0xff] %vm338, %v481
      %490 = vst.msk [vmem:[%s199 + $0x20] sm:$0xff] %vm338, %v482
      %491 = vst.msk [vmem:[%s199 + $0x28] sm:$0xff] %vm338, %v483
      %492 = vst.msk [vmem:[%s199 + $0x30] sm:$0xff] %vm338, %v484
      %493 = vst.msk [vmem:[%s199 + $0x38] sm:$0xff] %vm338, %v485
      %s494 = smul.u32 8, %s15
      %p495 = scmp.lt.s32.totalorder %s494, 15
      %s496 = scalar_select %p495, %s494, 15
      %s497 = smul.addr %s496, 8
      %s498 = scalar_lea.vmem %s4, %s497
      // Predicated region
      $region37: #{value_net_forward.4} parent=35 // pred_check
        %p499 = pneg %p122
      $region38: #{value_net_forward.4} parent=35 // pred_check_branch
        %501 = sbr.rel (%p499) target = $region40
      $region39: #{value_net_forward.4} parent=35 // pred_region
        %s502 = smul.u32 8, %s15
      $region40: #{value_net_forward.4} parent=35 // pred_fallthru
        _
    $region36: #{value_net_forward.4} parent=5 // pred_fallthru
      _
    %p503 = scmp.le.s32.totalorder 2, %s10
    // Predicated region
    $region41: #{value_net_forward.4} parent=5 // pred_check
      %p504 = pneg %p503
    $region42: #{value_net_forward.4} parent=5 // pred_check_branch
      %506 = sbr.rel (%p504) target = $region44
    $region43: #{value_net_forward.4} parent=5 // pred_region
      %s507 = ssub.s32 %s10, 2
      // Predicated region
      $region45: #{value_net_forward.4} parent=43 // pred_check
        %p508 = pneg %p128
      $region46: #{value_net_forward.4} parent=43 // pred_check_branch
        %510 = sbr.rel (%p508) target = $region48
      $region47: #{value_net_forward.4} parent=43 // pred_region
        %s511 = smul.u32 8, %s16
        %p512 = scmp.lt.s32.totalorder %s511, 15
        %s513 = scalar_select %p512, %s511, 15
        %s514 = smul.addr %s513, 8
        %s515 = scalar_lea.vmem %s4, %s514
      $region48: #{value_net_forward.4} parent=43 // pred_fallthru
        _
    $region44: #{value_net_forward.4} parent=5 // pred_fallthru
      _
  $region6: #{value_net_forward.4} parent=0 // loop_footer
    %s14 = sadd.s32 1, %s10
  $region7: #{value_net_forward.4} parent=0 // loop_footer_branch
    %9 = sbr.rel target = $region3
  $region8: #{value_net_forward.4} parent=0 // loop_exit
    _

// kernel: value_net_forward.6
$region0: #{value_net_forward.6}
  #allocation0 [shape = 'u32[]', space=smem, size = 0x4, offset = 0x4, fixed_abs, tag = 'smem constant byte address 0x4 - core index']
  #allocation1 [shape = 'u32[144,128]{1,0:T(1,128)}', space=vmem, size = 0x12000, scoped, tag = 'internal scratch']
  %s0 = inlined_call_operand.vmem [shape: f32[128,128], index: 0, kind: input, shape index: {}]
  %s1 = inlined_call_operand.vmem [shape: f32[128,32], index: 1, kind: input, shape index: {}]
  %s2 = inlined_call_operand.vmem [shape: f32[32,32], index: 2, kind: input, shape index: {}]
  %s3 = inlined_call_operand.vmem [shape: f32[1,32], index: 3, kind: input, shape index: {}]
  %s4 = inlined_call_operand.vmem [shape: f32[128,32], index: 4, kind: output, shape index: {}]
  %s5 = sld [smem:[#allocation0]]
  $region49: #{value_net_forward.6} parent=0
    _
  %s7 = ssub.s32 1, %s5
  %s8 = scalar_select 0, %s7, %s5
  loop: start=0, step=1, limit=4
  $region2: #{value_net_forward.6} parent=0 // loop_pre_header
    _
  $region3: #{value_net_forward.6} parent=0 // loop_header
    %s10 = sphi 0, %s14
    %p11 = scmp.ge.s32.totalorder %s10, 4
    %s20 = sphi 0, %s22
    %s23 = sphi 0, %s20
    %s24 = sphi 0, %s23
    %s40 = sphi 0, %s24
    %s44 = sphi 0, %s44
    %s46 = sphi 0, %s44
    %s47 = sphi 0, %s46
    %s61 = sphi 0, %s47
    %s65 = sphi 0, %s65
    %s67 = sphi 0, %s65
    %s68 = sphi 0, %s67
    %s82 = sphi 0, %s68
    %s86 = sphi 0, %s86
    %s88 = sphi 0, %s86
    %s89 = sphi 0, %s88
    %s103 = sphi 0, %s89
    %s109 = sphi 0, %s111
    %s112 = sphi 0, %s109
    %s113 = sphi 0, %s112
    %s129 = sphi 0, %s113
  $region4: #{value_net_forward.6} parent=0 // loop_header_branch
    %13 = sbr.rel (%p11) target = $region8
  $region5: #{value_net_forward.6} parent=0 // loop_body
    %s15 = ssub.s32 %s10, 1
    %s16 = ssub.s32 %s10, 2
    %s17 = sadd.s32 %s10, 1
    %s18 = ssub.s32 %s10, %s17
    %p19 = scmp.eq.s32.totalorder %s18, 0
    %s21 = sadd.s32 %s20, 1
    %s22 = scalar_select %p19, %s20, %s21
    %p25 = pneg %p19
    %p26 = scmp.eq.s32.totalorder %s10, 1
    %p27 = por %p25, %p26
    %p28 = scmp.ne.s32.totalorder %s20, %s23
    %p29 = scmp.eq.s32.totalorder %s10, 0
    %p30 = por %p28, %p29
    %p31 = scmp.ne.s32.totalorder %s20, %s23
    %p32 = scmp.eq.s32.totalorder %s15, 1
    %p33 = por %p31, %p32
    %p34 = scmp.ne.s32.totalorder %s23, %s24
    %p35 = scmp.eq.s32.totalorder %s15, 0
    %p36 = por %p34, %p35
    %p37 = scmp.ne.s32.totalorder %s23, %s24
    %p38 = scmp.eq.s32.totalorder %s16, 1
    %p39 = por %p37, %p38
    %p41 = scmp.ne.s32.totalorder %s24, %s40
    %p42 = scmp.eq.s32.totalorder %s16, 0
    %p43 = por %p41, %p42
    %s45 = sadd.s32 %s44, 1
    %p48 = scmp.eq.s32.totalorder %s10, 1
    %p49 = scmp.ne.s32.totalorder %s44, %s46
    %p50 = scmp.eq.s32.totalorder %s10, 0
    %p51 = por %p49, %p50
    %p52 = scmp.ne.s32.totalorder %s44, %s46
    %p53 = scmp.eq.s32.totalorder %s15, 1
    %p54 = por %p52, %p53
    %p55 = scmp.ne.s32.totalorder %s46, %s47
    %p56 = scmp.eq.s32.totalorder %s15, 0
    %p57 = por %p55, %p56
    %p58 = scmp.ne.s32.totalorder %s46, %s47
    %p59 = scmp.eq.s32.totalorder %s16, 1
    %p60 = por %p58, %p59
    %p62 = scmp.ne.s32.totalorder %s47, %s61
    %p63 = scmp.eq.s32.totalorder %s16, 0
    %p64 = por %p62, %p63
    %s66 = sadd.s32 %s65, 1
    %p69 = scmp.eq.s32.totalorder %s10, 1
    %p70 = scmp.ne.s32.totalorder %s65, %s67
    %p71 = scmp.eq.s32.totalorder %s10, 0
    %p72 = por %p70, %p71
    %p73 = scmp.ne.s32.totalorder %s65, %s67
    %p74 = scmp.eq.s32.totalorder %s15, 1
    %p75 = por %p73, %p74
    %p76 = scmp.ne.s32.totalorder %s67, %s68
    %p77 = scmp.eq.s32.totalorder %s15, 0
    %p78 = por %p76, %p77
    %p79 = scmp.ne.s32.totalorder %s67, %s68
    %p80 = scmp.eq.s32.totalorder %s16, 1
    %p81 = por %p79, %p80
    %p83 = scmp.ne.s32.totalorder %s68, %s82
    %p84 = scmp.eq.s32.totalorder %s16, 0
    %p85 = por %p83, %p84
    %s87 = sadd.s32 %s86, 1
    %p90 = scmp.eq.s32.totalorder %s10, 1
    %p91 = scmp.ne.s32.totalorder %s86, %s88
    %p92 = scmp.eq.s32.totalorder %s10, 0
    %p93 = por %p91, %p92
    %p94 = scmp.ne.s32.totalorder %s86, %s88
    %p95 = scmp.eq.s32.totalorder %s15, 1
    %p96 = por %p94, %p95
    %p97 = scmp.ne.s32.totalorder %s88, %s89
    %p98 = scmp.eq.s32.totalorder %s15, 0
    %p99 = por %p97, %p98
    %p100 = scmp.ne.s32.totalorder %s88, %s89
    %p101 = scmp.eq.s32.totalorder %s16, 1
    %p102 = por %p100, %p101
    %p104 = scmp.ne.s32.totalorder %s89, %s103
    %p105 = scmp.eq.s32.totalorder %s16, 0
    %p106 = por %p104, %p105
    %s107 = ssub.s32 %s10, %s17
    %p108 = scmp.eq.s32.totalorder %s107, 0
    %s110 = sadd.s32 %s109, 1
    %s111 = scalar_select %p108, %s109, %s110
    %p114 = pneg %p108
    %p115 = scmp.eq.s32.totalorder %s10, 1
    %p116 = por %p114, %p115
    %p117 = scmp.ne.s32.totalorder %s109, %s112
    %p118 = scmp.eq.s32.totalorder %s10, 0
    %p119 = por %p117, %p118
    %p120 = scmp.ne.s32.totalorder %s109, %s112
    %p121 = scmp.eq.s32.totalorder %s15, 1
    %p122 = por %p120, %p121
    %p123 = scmp.ne.s32.totalorder %s112, %s113
    %p124 = scmp.eq.s32.totalorder %s15, 0
    %p125 = por %p123, %p124
    %p126 = scmp.ne.s32.totalorder %s112, %s113
    %p127 = scmp.eq.s32.totalorder %s16, 1
    %p128 = por %p126, %p127
    %p130 = scmp.ne.s32.totalorder %s113, %s129
    %p131 = scmp.eq.s32.totalorder %s16, 0
    %p132 = por %p130, %p131
    %p133 = scmp.le.s32.totalorder 1, %s10
    %p134 = scmp.lt.s32.totalorder %s10, 3
    %p135 = pnand %p133, %p134
    %p136 = pneg %p135
    // Predicated region
    $region9: #{value_net_forward.6} parent=5 // pred_check
      _
    $region10: #{value_net_forward.6} parent=5 // pred_check_branch
      %138 = sbr.rel (%p135) target = $region12
    $region11: #{value_net_forward.6} parent=5 // pred_region
      %s139 = ssub.s32 %s10, 1
      // Predicated region
      $region13: #{value_net_forward.6} parent=11 // pred_check
        %p140 = pneg %p57
      $region14: #{value_net_forward.6} parent=11 // pred_check_branch
        %142 = sbr.rel (%p140) target = $region16
      $region15: #{value_net_forward.6} parent=11 // pred_region
        _
      $region16: #{value_net_forward.6} parent=11 // pred_fallthru
        _
      // Predicated region
      $region17: #{value_net_forward.6} parent=11 // pred_check
        %p143 = pneg %p78
      $region18: #{value_net_forward.6} parent=11 // pred_check_branch
        %145 = sbr.rel (%p143) target = $region20
      $region19: #{value_net_forward.6} parent=11 // pred_region
        _
      $region20: #{value_net_forward.6} parent=11 // pred_fallthru
        _
      // Predicated region
      $region21: #{value_net_forward.6} parent=11 // pred_check
        %p146 = pneg %p99
      $region22: #{value_net_forward.6} parent=11 // pred_check_branch
        %148 = sbr.rel (%p146) target = $region24
      $region23: #{value_net_forward.6} parent=11 // pred_region
        _
      $region24: #{value_net_forward.6} parent=11 // pred_fallthru
        _
    $region12: #{value_net_forward.6} parent=5 // pred_fallthru
      _
    %p149 = scmp.lt.s32.totalorder %s10, 2
    // Predicated region
    $region25: #{value_net_forward.6} parent=5 // pred_check
      %p150 = pneg %p149
    $region26: #{value_net_forward.6} parent=5 // pred_check_branch
      %152 = sbr.rel (%p150) target = $region28
    $region27: #{value_net_forward.6} parent=5 // pred_region
      // Predicated region
      $region29: #{value_net_forward.6} parent=27 // pred_check
        %p153 = pneg %p30
      $region30: #{value_net_forward.6} parent=27 // pred_check_branch
        %155 = sbr.rel (%p153) target = $region32
      $region31: #{value_net_forward.6} parent=27 // pred_region
        %s156 = smul.u32 8, %s10
        %p157 = scmp.lt.s32.totalorder %s156, 15
        %s158 = scalar_select %p157, %s156, 15
        %s159 = smul.addr %s158, 8
        %s160 = scalar_lea.vmem %s0, %s159
        %s161 = smul.u32 8, %s10
      $region32: #{value_net_forward.6} parent=27 // pred_fallthru
        _
    $region28: #{value_net_forward.6} parent=5 // pred_fallthru
      _
    %p162 = scmp.le.s32.totalorder 1, %s10
    %p163 = scmp.lt.s32.totalorder %s10, 3
    %p164 = pnand %p162, %p163
    %p165 = pneg %p164
    // Predicated region
    $region33: #{value_net_forward.6} parent=5 // pred_check
      _
    $region34: #{value_net_forward.6} parent=5 // pred_check_branch
      %167 = sbr.rel (%p164) target = $region36
    $region35: #{value_net_forward.6} parent=5 // pred_region
      %s168 = ssub.s32 %s10, 1
      %s169 = smul.u32 8, %s15
      %p170 = scmp.lt.s32.totalorder %s169, 15
      %s171 = scalar_select %p170, %s169, 15
      %s172 = smul.addr %s171, 8
      %s173 = scalar_lea.vmem %s0, %s172
      %p174 = pneg %p36
      %p175 = pneg %p33
      %p176 = pneg %p57
      %p177 = pneg %p54
      %p178 = pneg %p78
      %p179 = pneg %p75
      %p180 = pneg %p99
      %p181 = pneg %p96
      %p182 = pneg %p125
      %p183 = pneg %p122
      %s184 = smul.u32 8, %s15
      %p185 = scmp.lt.s32.totalorder %s184, 15
      %s186 = scalar_select %p185, %s184, 15
      %s187 = smul.addr %s186, 8
      %s188 = scalar_lea.vmem %s4, %s187
      %s189 = smul.u32 8, %s15
      %p190 = scmp.lt.s32.totalorder %s189, 15
      %s191 = scalar_select %p190, %s189, 15
      %s192 = smul.addr %s191, 8
      %s193 = scalar_lea.vmem %s0, %s192
      %s194 = smul.u32 8, %s15
      %s195 = smul.u32 8, %s15
      %p196 = scmp.lt.s32.totalorder %s195, 15
      %s197 = scalar_select %p196, %s195, 15
      %s198 = smul.addr %s197, 8
      %s199 = scalar_lea.vmem %s4, %s198
      %s200 = smul.u32 8, %s15
      %v201 = vld [vmem:[%s193] sm:$0xff]
      %v202 = vld [vmem:[%s193 + $0x8] sm:$0xff]
      %v203 = vld [vmem:[%s193 + $0x10] sm:$0xff]
      %v204 = vld [vmem:[%s193 + $0x18] sm:$0xff]
      %v205 = vld [vmem:[%s193 + $0x20] sm:$0xff]
      %v206 = vld [vmem:[%s193 + $0x28] sm:$0xff]
      %v207 = vld [vmem:[%s193 + $0x30] sm:$0xff]
      %v208 = vld [vmem:[%s193 + $0x38] sm:$0xff]
      %v209 = vld [vmem:[%s1] sm:$0xff]
      %v210 = vld [vmem:[%s1 + $0x8] sm:$0xff]
      %v211 = vld [vmem:[%s1 + $0x10] sm:$0xff]
      %v212 = vld [vmem:[%s1 + $0x18] sm:$0xff]
      %v213 = vld [vmem:[%s1 + $0x20] sm:$0xff]
      %v214 = vld [vmem:[%s1 + $0x28] sm:$0xff]
      %v215 = vld [vmem:[%s1 + $0x30] sm:$0xff]
      %v216 = vld [vmem:[%s1 + $0x38] sm:$0xff]
      %v217 = vld [vmem:[%s1 + $0x40] sm:$0xff]
      %v218 = vld [vmem:[%s1 + $0x48] sm:$0xff]
      %v219 = vld [vmem:[%s1 + $0x50] sm:$0xff]
      %v220 = vld [vmem:[%s1 + $0x58] sm:$0xff]
      %v221 = vld [vmem:[%s1 + $0x60] sm:$0xff]
      %v222 = vld [vmem:[%s1 + $0x68] sm:$0xff]
      %v223 = vld [vmem:[%s1 + $0x70] sm:$0xff]
      %v224 = vld [vmem:[%s1 + $0x78] sm:$0xff]
      %225 = vmatprep.subr.mxu0 0.0
      %226 = vmatpush1.msra.mxu0 %v209
      %227 = vmatprep.subr.mxu0 0.0
      %228 = vmatpush1.msra.mxu0 %v210
      %229 = vmatprep.subr.mxu0 0.0
      %230 = vmatpush1.msra.mxu0 %v211
      %231 = vmatprep.subr.mxu0 0.0
      %232 = vmatpush1.msra.mxu0 %v212
      %233 = vmatprep.subr.mxu0 0.0
      %234 = vmatpush1.msra.mxu0 %v213
      %235 = vmatprep.subr.mxu0 0.0
      %236 = vmatpush1.msra.mxu0 %v214
      %237 = vmatprep.subr.mxu0 0.0
      %238 = vmatpush1.msra.mxu0 %v215
      %239 = vmatprep.subr.mxu0 0.0
      %240 = vmatpush1.msra.mxu0 %v216
      %241 = vmatprep.subr.mxu0 0.0
      %242 = vmatpush1.msra.mxu0 %v217
      %243 = vmatprep.subr.mxu0 0.0
      %244 = vmatpush1.msra.mxu0 %v218
      %245 = vmatprep.subr.mxu0 0.0
      %246 = vmatpush1.msra.mxu0 %v219
      %247 = vmatprep.subr.mxu0 0.0
      %248 = vmatpush1.msra.mxu0 %v220
      %249 = vmatprep.subr.mxu0 0.0
      %250 = vmatpush1.msra.mxu0 %v221
      %251 = vmatprep.subr.mxu0 0.0
      %252 = vmatpush1.msra.mxu0 %v222
      %253 = vmatprep.subr.mxu0 0.0
      %254 = vmatpush1.msra.mxu0 %v223
      %255 = vmatprep.subr.mxu0 0.0
      %256 = vmatpush1.msra.mxu0 %v224
      %257 = vmatprep.subr.mxu0 0.0
      %258 = vmatpush1.msra.mxu0 0.0
      %259 = vmatprep.subr.mxu0 0.0
      %260 = vmatpush1.msra.mxu0 0.0
      %261 = vmatprep.subr.mxu0 0.0
      %262 = vmatpush1.msra.mxu0 0.0
      %263 = vmatprep.subr.mxu0 0.0
      %264 = vmatpush1.msra.mxu0 0.0
      %265 = vmatprep.subr.mxu0 0.0
      %266 = vmatpush1.msra.mxu0 0.0
      %267 = vmatprep.subr.mxu0 0.0
      %268 = vmatpush1.msra.mxu0 0.0
      %269 = vmatprep.subr.mxu0 0.0
      %270 = vmatpush1.msra.mxu0 0.0
      %271 = vmatprep.subr.mxu0 0.0
      %272 = vmatpush1.msra.mxu0 0.0
      %273 = vmatprep.subr.mxu0 0.0
      %274 = vmatpush1.msra.mxu0 0.0
      %275 = vmatprep.subr.mxu0 0.0
      %276 = vmatpush1.msra.mxu0 0.0
      %277 = vmatprep.subr.mxu0 0.0
      %278 = vmatpush1.msra.mxu0 0.0
      %279 = vmatprep.subr.mxu0 0.0
      %280 = vmatpush1.msra.mxu0 0.0
      %281 = vmatprep.subr.mxu0 0.0
      %282 = vmatpush1.msra.mxu0 0.0
      %283 = vmatprep.subr.mxu0 0.0
      %284 = vmatpush1.msra.mxu0 0.0
      %285 = vmatprep.subr.mxu0 0.0
      %286 = vmatpush1.msra.mxu0 0.0
      %287 = vmatprep.subr.mxu0 0.0
      %288 = vmatpush1.msra.mxu0 0.0
      %289 = vmatprep.mubr.f32.mxu0 0.0
      %290 = vmatmul.mubr.f32.gmra.mrb[0].mxu0 %v201
      %v291 = vpop.f32.mrb[0].mxu0
      %v292 = vadd.f32 0.0, %v291
      %v293 = vpop.f32.mrb[0].mxu0
      %294 = vmatprep.mubr.f32.mxu0 0.0
      %295 = vmatmul.mubr.f32.gmra.mrb[0].mxu0 %v202
      %v296 = vpop.f32.mrb[0].mxu0
      %v297 = vadd.f32 0.0, %v296
      %v298 = vpop.f32.mrb[0].mxu0
      %299 = vmatprep.mubr.f32.mxu0 0.0
      %300 = vmatmul.mubr.f32.gmra.mrb[0].mxu0 %v203
      %v301 = vpop.f32.mrb[0].mxu0
      %v302 = vadd.f32 0.0, %v301
      %v303 = vpop.f32.mrb[0].mxu0
      %304 = vmatprep.mubr.f32.mxu0 0.0
      %305 = vmatmul.mubr.f32.gmra.mrb[0].mxu0 %v204
      %v306 = vpop.f32.mrb[0].mxu0
      %v307 = vadd.f32 0.0, %v306
      %v308 = vpop.f32.mrb[0].mxu0
      %309 = vmatprep.mubr.f32.mxu0 0.0
      %310 = vmatmul.mubr.f32.gmra.mrb[0].mxu0 %v205
      %v311 = vpop.f32.mrb[0].mxu0
      %v312 = vadd.f32 0.0, %v311
      %v313 = vpop.f32.mrb[0].mxu0
      %314 = vmatprep.mubr.f32.mxu0 0.0
      %315 = vmatmul.mubr.f32.gmra.mrb[0].mxu0 %v206
      %v316 = vpop.f32.mrb[0].mxu0
      %v317 = vadd.f32 0.0, %v316
      %v318 = vpop.f32.mrb[0].mxu0
      %319 = vmatprep.mubr.f32.mxu0 0.0
      %320 = vmatmul.mubr.f32.gmra.mrb[0].mxu0 %v207
      %v321 = vpop.f32.mrb[0].mxu0
      %v322 = vadd.f32 0.0, %v321
      %v323 = vpop.f32.mrb[0].mxu0
      %324 = vmatprep.mubr.f32.mxu0 0.0
      %325 = vmatmul.mubr.f32.gmra.mrb[0].mxu0 %v208
      %v326 = vpop.f32.mrb[0].mxu0
      %v327 = vadd.f32 0.0, %v326
      %v328 = vpop.f32.mrb[0].mxu0
      %329 = vdwg.mxu0
      %v330 = vld [vmem:[%s2] sm:$0xff]
      %v331 = vld [vmem:[%s2 + $0x8] sm:$0xff]
      %v332 = vld [vmem:[%s2 + $0x10] sm:$0xff]
      %v333 = vld [vmem:[%s2 + $0x18] sm:$0xff]
      %v334 = vld [vmem:[%s3] sm:$0x1]
      %v336 = vlaneseq
      %v337 = vshrl.u32 %v336, 7
      %v338 = vsub.s32 0, %v337
      %v339 = vrot.slane %v334, %v338
      %vm341 = vcmask 261120
      %v343 = vsel %vm341, %v292, 0
      %v346 = vsel %vm341, %v297, 0
      %v349 = vsel %vm341, %v302, 0
      %v352 = vsel %vm341, %v307, 0
      %v355 = vsel %vm341, %v312, 0
      %v358 = vsel %vm341, %v317, 0
      %v361 = vsel %vm341, %v322, 0
      %v364 = vsel %vm341, %v327, 0
      %366 = vmatprep.subr.mxu0 0.0
      %367 = vmatpush1.msra.mxu0 %v330
      %368 = vmatprep.subr.mxu0 0.0
      %369 = vmatpush1.msra.mxu0 %v331
      %370 = vmatprep.subr.mxu0 0.0
      %371 = vmatpush1.msra.mxu0 %v332
      %372 = vmatprep.subr.mxu0 0.0
      %373 = vmatpush1.msra.mxu0 %v333
      %374 = vmatprep.subr.mxu0 0.0
      %375 = vmatpush1.msra.mxu0 0.0
      %376 = vmatprep.subr.mxu0 0.0
      %377 = vmatpush1.msra.mxu0 0.0
      %378 = vmatprep.subr.mxu0 0.0
      %379 = vmatpush1.msra.mxu0 0.0
      %380 = vmatprep.subr.mxu0 0.0
      %381 = vmatpush1.msra.mxu0 0.0
      %382 = vmatprep.subr.mxu0 0.0
      %383 = vmatpush1.msra.mxu0 0.0
      %384 = vmatprep.subr.mxu0 0.0
      %385 = vmatpush1.msra.mxu0 0.0
      %386 = vmatprep.subr.mxu0 0.0
      %387 = vmatpush1.msra.mxu0 0.0
      %388 = vmatprep.subr.mxu0 0.0
      %389 = vmatpush1.msra.mxu0 0.0
      %390 = vmatprep.subr.mxu0 0.0
      %391 = vmatpush1.msra.mxu0 0.0
      %392 = vmatprep.subr.mxu0 0.0
      %393 = vmatpush1.msra.mxu0 0.0
      %394 = vmatprep.subr.mxu0 0.0
      %395 = vmatpush1.msra.mxu0 0.0
      %396 = vmatprep.subr.mxu0 0.0
      %397 = vmatpush1.msra.mxu0 0.0
      %398 = vmatprep.subr.mxu0 0.0
      %399 = vmatpush1.msra.mxu0 0.0
      %400 = vmatprep.subr.mxu0 0.0
      %401 = vmatpush1.msra.mxu0 0.0
      %402 = vmatprep.subr.mxu0 0.0
      %403 = vmatpush1.msra.mxu0 0.0
      %404 = vmatprep.subr.mxu0 0.0
      %405 = vmatpush1.msra.mxu0 0.0
      %406 = vmatprep.subr.mxu0 0.0
      %407 = vmatpush1.msra.mxu0 0.0
      %408 = vmatprep.subr.mxu0 0.0
      %409 = vmatpush1.msra.mxu0 0.0
      %410 = vmatprep.subr.mxu0 0.0
      %411 = vmatpush1.msra.mxu0 0.0
      %412 = vmatprep.subr.mxu0 0.0
      %413 = vmatpush1.msra.mxu0 0.0
      %414 = vmatprep.subr.mxu0 0.0
      %415 = vmatpush1.msra.mxu0 0.0
      %416 = vmatprep.subr.mxu0 0.0
      %417 = vmatpush1.msra.mxu0 0.0
      %418 = vmatprep.subr.mxu0 0.0
      %419 = vmatpush1.msra.mxu0 0.0
      %420 = vmatprep.subr.mxu0 0.0
      %421 = vmatpush1.msra.mxu0 0.0
      %422 = vmatprep.subr.mxu0 0.0
      %423 = vmatpush1.msra.mxu0 0.0
      %424 = vmatprep.subr.mxu0 0.0
      %425 = vmatpush1.msra.mxu0 0.0
      %426 = vmatprep.subr.mxu0 0.0
      %427 = vmatpush1.msra.mxu0 0.0
      %428 = vmatprep.subr.mxu0 0.0
      %429 = vmatpush1.msra.mxu0 0.0
      %430 = vmatprep.mubr.f32.mxu0 0.0
      %431 = vmatmul.mubr.f32.gmra.mrb[0].mxu0 %v343
      %v432 = vpop.f32.mrb[0].mxu0
      %v433 = vadd.f32 %v339, %v432
      %v434 = vpop.f32.mrb[0].mxu0
      %435 = vmatprep.mubr.f32.mxu0 0.0
      %436 = vmatmul.mubr.f32.gmra.mrb[0].mxu0 %v346
      %v437 = vpop.f32.mrb[0].mxu0
      %v438 = vadd.f32 %v339, %v437
      %v439 = vpop.f32.mrb[0].mxu0
      %440 = vmatprep.mubr.f32.mxu0 0.0
      %441 = vmatmul.mubr.f32.gmra.mrb[0].mxu0 %v349
      %v442 = vpop.f32.mrb[0].mxu0
      %v443 = vadd.f32 %v339, %v442
      %v444 = vpop.f32.mrb[0].mxu0
      %445 = vmatprep.mubr.f32.mxu0 0.0
      %446 = vmatmul.mubr.f32.gmra.mrb[0].mxu0 %v352
      %v447 = vpop.f32.mrb[0].mxu0
      %v448 = vadd.f32 %v339, %v447
      %v449 = vpop.f32.mrb[0].mxu0
      %450 = vmatprep.mubr.f32.mxu0 0.0
      %451 = vmatmul.mubr.f32.gmra.mrb[0].mxu0 %v355
      %v452 = vpop.f32.mrb[0].mxu0
      %v453 = vadd.f32 %v339, %v452
      %v454 = vpop.f32.mrb[0].mxu0
      %455 = vmatprep.mubr.f32.mxu0 0.0
      %456 = vmatmul.mubr.f32.gmra.mrb[0].mxu0 %v358
      %v457 = vpop.f32.mrb[0].mxu0
      %v458 = vadd.f32 %v339, %v457
      %v459 = vpop.f32.mrb[0].mxu0
      %460 = vmatprep.mubr.f32.mxu0 0.0
      %461 = vmatmul.mubr.f32.gmra.mrb[0].mxu0 %v361
      %v462 = vpop.f32.mrb[0].mxu0
      %v463 = vadd.f32 %v339, %v462
      %v464 = vpop.f32.mrb[0].mxu0
      %465 = vmatprep.mubr.f32.mxu0 0.0
      %466 = vmatmul.mubr.f32.gmra.mrb[0].mxu0 %v364
      %v467 = vpop.f32.mrb[0].mxu0
      %v468 = vadd.f32 %v339, %v467
      %v469 = vpop.f32.mrb[0].mxu0
      %470 = vdwg.mxu0
      %471 = vst.msk [vmem:[%s199] sm:$0xff] %vm341, %v433
      %472 = vst.msk [vmem:[%s199 + $0x8] sm:$0xff] %vm341, %v438
      %473 = vst.msk [vmem:[%s199 + $0x10] sm:$0xff] %vm341, %v443
      %474 = vst.msk [vmem:[%s199 + $0x18] sm:$0xff] %vm341, %v448
      %475 = vst.msk [vmem:[%s199 + $0x20] sm:$0xff] %vm341, %v453
      %476 = vst.msk [vmem:[%s199 + $0x28] sm:$0xff] %vm341, %v458
      %477 = vst.msk [vmem:[%s199 + $0x30] sm:$0xff] %vm341, %v463
      %478 = vst.msk [vmem:[%s199 + $0x38] sm:$0xff] %vm341, %v468
      %s479 = smul.u32 8, %s15
      %p480 = scmp.lt.s32.totalorder %s479, 15
      %s481 = scalar_select %p480, %s479, 15
      %s482 = smul.addr %s481, 8
      %s483 = scalar_lea.vmem %s4, %s482
      // Predicated region
      $region37: #{value_net_forward.6} parent=35 // pred_check
        %p484 = pneg %p122
      $region38: #{value_net_forward.6} parent=35 // pred_check_branch
        %486 = sbr.rel (%p484) target = $region40
      $region39: #{value_net_forward.6} parent=35 // pred_region
        %s487 = smul.u32 8, %s15
      $region40: #{value_net_forward.6} parent=35 // pred_fallthru
        _
    $region36: #{value_net_forward.6} parent=5 // pred_fallthru
      _
    %p488 = scmp.le.s32.totalorder 2, %s10
    // Predicated region
    $region41: #{value_net_forward.6} parent=5 // pred_check
      %p489 = pneg %p488
    $region42: #{value_net_forward.6} parent=5 // pred_check_branch
      %491 = sbr.rel (%p489) target = $region44
    $region43: #{value_net_forward.6} parent=5 // pred_region
      %s492 = ssub.s32 %s10, 2
      // Predicated region
      $region45: #{value_net_forward.6} parent=43 // pred_check
        %p493 = pneg %p128
      $region46: #{value_net_forward.6} parent=43 // pred_check_branch
        %495 = sbr.rel (%p493) target = $region48
      $region47: #{value_net_forward.6} parent=43 // pred_region
        %s496 = smul.u32 8, %s16
        %p497 = scmp.lt.s32.totalorder %s496, 15
        %s498 = scalar_select %p497, %s496, 15
        %s499 = smul.addr %s498, 8
        %s500 = scalar_lea.vmem %s4, %s499
      $region48: #{value_net_forward.6} parent=43 // pred_fallthru
        _
    $region44: #{value_net_forward.6} parent=5 // pred_fallthru
      _
  $region6: #{value_net_forward.6} parent=0 // loop_footer
    %s14 = sadd.s32 1, %s10
  $region7: #{value_net_forward.6} parent=0 // loop_footer_branch
    %9 = sbr.rel target = $region3
  $region8: #{value_net_forward.6} parent=0 // loop_exit
    _

// kernel: value_net_forward.7
$region0: #{value_net_forward.7}
  #allocation0 [shape = 'u32[]', space=smem, size = 0x4, offset = 0x4, fixed_abs, tag = 'smem constant byte address 0x4 - core index']
  #allocation1 [shape = 'u32[144,128]{1,0:T(1,128)}', space=vmem, size = 0x12000, scoped, tag = 'internal scratch']
  #allocation2 [shape = 'f32[1,1]{1,0:T(1,128)S(1)}', space=vmem, size = 0x200, scoped, tag = 'scoped memory for value_net_forward.7']
  %s0 = inlined_call_operand.vmem [shape: f32[2,128], index: 0, kind: input, shape index: {}]
  %s1 = inlined_call_operand.vmem [shape: f32[128,32], index: 1, kind: input, shape index: {}]
  %s2 = inlined_call_operand.vmem [shape: f32[32,1], index: 2, kind: input, shape index: {}]
  %s3 = inlined_call_operand.<no memory space> [shape: f32[1,1], index: 3, kind: input, shape index: {}]
  %s4 = inlined_call_operand.vmem [shape: f32[2,1], index: 4, kind: output, shape index: {}]
  %s5 = sld [smem:[#allocation0]]
  $region26: #{value_net_forward.7} parent=0
    _
  %s7 = ssub.s32 1, %s5
  %s8 = scalar_select 0, %s7, %s5
  %v9 = vstv %s3
  %10 = vst [vmem:[#allocation2] sm:$0x1] %v9
  // Predicated region
  $region2: #{value_net_forward.7} parent=0 // pred_check
    _
  $region3: #{value_net_forward.7} parent=0 // pred_check_branch
    %12 = sbr.rel (0) target = $region5
  $region4: #{value_net_forward.7} parent=0 // pred_region
    _
  $region5: #{value_net_forward.7} parent=0 // pred_fallthru
    _
  // Predicated region
  $region6: #{value_net_forward.7} parent=0 // pred_check
    _
  $region7: #{value_net_forward.7} parent=0 // pred_check_branch
    %14 = sbr.rel (0) target = $region9
  $region8: #{value_net_forward.7} parent=0 // pred_region
    _
  $region9: #{value_net_forward.7} parent=0 // pred_fallthru
    _
  // Predicated region
  $region10: #{value_net_forward.7} parent=0 // pred_check
    _
  $region11: #{value_net_forward.7} parent=0 // pred_check_branch
    %16 = sbr.rel (0) target = $region13
  $region12: #{value_net_forward.7} parent=0 // pred_region
    _
  $region13: #{value_net_forward.7} parent=0 // pred_fallthru
    _
  // Predicated region
  $region14: #{value_net_forward.7} parent=0 // pred_check
    _
  $region15: #{value_net_forward.7} parent=0 // pred_check_branch
    %18 = sbr.rel (0) target = $region17
  $region16: #{value_net_forward.7} parent=0 // pred_region
    _
  $region17: #{value_net_forward.7} parent=0 // pred_fallthru
    _
  %v19 = vld [vmem:[%s1] sm:$0xff]
  %v20 = vld [vmem:[%s1 + $0x8] sm:$0xff]
  %v21 = vld [vmem:[%s1 + $0x10] sm:$0xff]
  %v22 = vld [vmem:[%s1 + $0x18] sm:$0xff]
  %v23 = vld [vmem:[%s1 + $0x20] sm:$0xff]
  %v24 = vld [vmem:[%s1 + $0x28] sm:$0xff]
  %v25 = vld [vmem:[%s1 + $0x30] sm:$0xff]
  %v26 = vld [vmem:[%s1 + $0x38] sm:$0xff]
  %v27 = vld [vmem:[%s1 + $0x40] sm:$0xff]
  %v28 = vld [vmem:[%s1 + $0x48] sm:$0xff]
  %v29 = vld [vmem:[%s1 + $0x50] sm:$0xff]
  %v30 = vld [vmem:[%s1 + $0x58] sm:$0xff]
  %v31 = vld [vmem:[%s1 + $0x60] sm:$0xff]
  %v32 = vld [vmem:[%s1 + $0x68] sm:$0xff]
  %v33 = vld [vmem:[%s1 + $0x70] sm:$0xff]
  %v34 = vld [vmem:[%s1 + $0x78] sm:$0xff]
  %v35 = vld [vmem:[%s2] sm:$0xff]
  %v36 = vld [vmem:[%s2 + $0x8] sm:$0xff]
  %v37 = vld [vmem:[%s2 + $0x10] sm:$0xff]
  %v38 = vld [vmem:[%s2 + $0x18] sm:$0xff]
  %vm39 = vcmask 261120
  %v41 = vsel %vm39, %v19, 0
  %v44 = vsel %vm39, %v20, 0
  %v47 = vsel %vm39, %v21, 0
  %v50 = vsel %vm39, %v22, 0
  %v53 = vsel %vm39, %v23, 0
  %v56 = vsel %vm39, %v24, 0
  %v59 = vsel %vm39, %v25, 0
  %v62 = vsel %vm39, %v26, 0
  %v65 = vsel %vm39, %v27, 0
  %v68 = vsel %vm39, %v28, 0
  %v71 = vsel %vm39, %v29, 0
  %v74 = vsel %vm39, %v30, 0
  %v77 = vsel %vm39, %v31, 0
  %v80 = vsel %vm39, %v32, 0
  %v83 = vsel %vm39, %v33, 0
  %v86 = vsel %vm39, %v34, 0
  %88 = vmatprep.subr.mxu0 0.0
  %89 = vmatpush1.msra.mxu0 %v35
  %90 = vmatprep.subr.mxu0 0.0
  %91 = vmatpush1.msra.mxu0 %v36
  %92 = vmatprep.subr.mxu0 0.0
  %93 = vmatpush1.msra.mxu0 %v37
  %94 = vmatprep.subr.mxu0 0.0
  %95 = vmatpush1.msra.mxu0 %v38
  %96 = vmatprep.subr.mxu0 0.0
  %97 = vmatpush1.msra.mxu0 0.0
  %98 = vmatprep.subr.mxu0 0.0
  %99 = vmatpush1.msra.mxu0 0.0
  %100 = vmatprep.subr.mxu0 0.0
  %101 = vmatpush1.msra.mxu0 0.0
  %102 = vmatprep.subr.mxu0 0.0
  %103 = vmatpush1.msra.mxu0 0.0
  %104 = vmatprep.subr.mxu0 0.0
  %105 = vmatpush1.msra.mxu0 0.0
  %106 = vmatprep.subr.mxu0 0.0
  %107 = vmatpush1.msra.mxu0 0.0
  %108 = vmatprep.subr.mxu0 0.0
  %109 = vmatpush1.msra.mxu0 0.0
  %110 = vmatprep.subr.mxu0 0.0
  %111 = vmatpush1.msra.mxu0 0.0
  %112 = vmatprep.subr.mxu0 0.0
  %113 = vmatpush1.msra.mxu0 0.0
  %114 = vmatprep.subr.mxu0 0.0
  %115 = vmatpush1.msra.mxu0 0.0
  %116 = vmatprep.subr.mxu0 0.0
  %117 = vmatpush1.msra.mxu0 0.0
  %118 = vmatprep.subr.mxu0 0.0
  %119 = vmatpush1.msra.mxu0 0.0
  %120 = vmatprep.subr.mxu0 0.0
  %121 = vmatpush1.msra.mxu0 0.0
  %122 = vmatprep.subr.mxu0 0.0
  %123 = vmatpush1.msra.mxu0 0.0
  %124 = vmatprep.subr.mxu0 0.0
  %125 = vmatpush1.msra.mxu0 0.0
  %126 = vmatprep.subr.mxu0 0.0
  %127 = vmatpush1.msra.mxu0 0.0
  %128 = vmatprep.subr.mxu0 0.0
  %129 = vmatpush1.msra.mxu0 0.0
  %130 = vmatprep.subr.mxu0 0.0
  %131 = vmatpush1.msra.mxu0 0.0
  %132 = vmatprep.subr.mxu0 0.0
  %133 = vmatpush1.msra.mxu0 0.0
  %134 = vmatprep.subr.mxu0 0.0
  %135 = vmatpush1.msra.mxu0 0.0
  %136 = vmatprep.subr.mxu0 0.0
  %137 = vmatpush1.msra.mxu0 0.0
  %138 = vmatprep.subr.mxu0 0.0
  %139 = vmatpush1.msra.mxu0 0.0
  %140 = vmatprep.subr.mxu0 0.0
  %141 = vmatpush1.msra.mxu0 0.0
  %142 = vmatprep.subr.mxu0 0.0
  %143 = vmatpush1.msra.mxu0 0.0
  %144 = vmatprep.subr.mxu0 0.0
  %145 = vmatpush1.msra.mxu0 0.0
  %146 = vmatprep.subr.mxu0 0.0
  %147 = vmatpush1.msra.mxu0 0.0
  %148 = vmatprep.subr.mxu0 0.0
  %149 = vmatpush1.msra.mxu0 0.0
  %150 = vmatprep.subr.mxu0 0.0
  %151 = vmatpush1.msra.mxu0 0.0
  %152 = vmatprep.mubr.f32.mxu0 0.0
  %153 = vmatmul.mubr.f32.gmra.mrb[0].mxu0 %v41
  %v154 = vpop.f32.mrb[0].mxu0
  %v155 = vadd.f32 0.0, %v154
  %v156 = vpop.f32.mrb[0].mxu0
  %157 = vmatprep.mubr.f32.mxu0 0.0
  %158 = vmatmul.mubr.f32.gmra.mrb[0].mxu0 %v44
  %v159 = vpop.f32.mrb[0].mxu0
  %v160 = vadd.f32 0.0, %v159
  %v161 = vpop.f32.mrb[0].mxu0
  %162 = vmatprep.mubr.f32.mxu0 0.0
  %163 = vmatmul.mubr.f32.gmra.mrb[0].mxu0 %v47
  %v164 = vpop.f32.mrb[0].mxu0
  %v165 = vadd.f32 0.0, %v164
  %v166 = vpop.f32.mrb[0].mxu0
  %167 = vmatprep.mubr.f32.mxu0 0.0
  %168 = vmatmul.mubr.f32.gmra.mrb[0].mxu0 %v50
  %v169 = vpop.f32.mrb[0].mxu0
  %v170 = vadd.f32 0.0, %v169
  %v171 = vpop.f32.mrb[0].mxu0
  %172 = vmatprep.mubr.f32.mxu0 0.0
  %173 = vmatmul.mubr.f32.gmra.mrb[0].mxu0 %v53
  %v174 = vpop.f32.mrb[0].mxu0
  %v175 = vadd.f32 0.0, %v174
  %v176 = vpop.f32.mrb[0].mxu0
  %177 = vmatprep.mubr.f32.mxu0 0.0
  %178 = vmatmul.mubr.f32.gmra.mrb[0].mxu0 %v56
  %v179 = vpop.f32.mrb[0].mxu0
  %v180 = vadd.f32 0.0, %v179
  %v181 = vpop.f32.mrb[0].mxu0
  %182 = vmatprep.mubr.f32.mxu0 0.0
  %183 = vmatmul.mubr.f32.gmra.mrb[0].mxu0 %v59
  %v184 = vpop.f32.mrb[0].mxu0
  %v185 = vadd.f32 0.0, %v184
  %v186 = vpop.f32.mrb[0].mxu0
  %187 = vmatprep.mubr.f32.mxu0 0.0
  %188 = vmatmul.mubr.f32.gmra.mrb[0].mxu0 %v62
  %v189 = vpop.f32.mrb[0].mxu0
  %v190 = vadd.f32 0.0, %v189
  %v191 = vpop.f32.mrb[0].mxu0
  %192 = vmatprep.mubr.f32.mxu0 0.0
  %193 = vmatmul.mubr.f32.gmra.mrb[0].mxu0 %v65
  %v194 = vpop.f32.mrb[0].mxu0
  %v195 = vadd.f32 0.0, %v194
  %v196 = vpop.f32.mrb[0].mxu0
  %197 = vmatprep.mubr.f32.mxu0 0.0
  %198 = vmatmul.mubr.f32.gmra.mrb[0].mxu0 %v68
  %v199 = vpop.f32.mrb[0].mxu0
  %v200 = vadd.f32 0.0, %v199
  %v201 = vpop.f32.mrb[0].mxu0
  %202 = vmatprep.mubr.f32.mxu0 0.0
  %203 = vmatmul.mubr.f32.gmra.mrb[0].mxu0 %v71
  %v204 = vpop.f32.mrb[0].mxu0
  %v205 = vadd.f32 0.0, %v204
  %v206 = vpop.f32.mrb[0].mxu0
  %207 = vmatprep.mubr.f32.mxu0 0.0
  %208 = vmatmul.mubr.f32.gmra.mrb[0].mxu0 %v74
  %v209 = vpop.f32.mrb[0].mxu0
  %v210 = vadd.f32 0.0, %v209
  %v211 = vpop.f32.mrb[0].mxu0
  %212 = vmatprep.mubr.f32.mxu0 0.0
  %213 = vmatmul.mubr.f32.gmra.mrb[0].mxu0 %v77
  %v214 = vpop.f32.mrb[0].mxu0
  %v215 = vadd.f32 0.0, %v214
  %v216 = vpop.f32.mrb[0].mxu0
  %217 = vmatprep.mubr.f32.mxu0 0.0
  %218 = vmatmul.mubr.f32.gmra.mrb[0].mxu0 %v80
  %v219 = vpop.f32.mrb[0].mxu0
  %v220 = vadd.f32 0.0, %v219
  %v221 = vpop.f32.mrb[0].mxu0
  %222 = vmatprep.mubr.f32.mxu0 0.0
  %223 = vmatmul.mubr.f32.gmra.mrb[0].mxu0 %v83
  %v224 = vpop.f32.mrb[0].mxu0
  %v225 = vadd.f32 0.0, %v224
  %v226 = vpop.f32.mrb[0].mxu0
  %227 = vmatprep.mubr.f32.mxu0 0.0
  %228 = vmatmul.mubr.f32.gmra.mrb[0].mxu0 %v86
  %v229 = vpop.f32.mrb[0].mxu0
  %v230 = vadd.f32 0.0, %v229
  %v231 = vpop.f32.mrb[0].mxu0
  %232 = vdwg.mxu0
  %v233 = vld [vmem:[%s0] sm:$0x3]
  %v234 = vld [vmem:[#allocation2] sm:$0x1]
  %v236 = vlaneseq
  %v237 = vshrl.u32 %v236, 7
  %v238 = vsub.s32 0, %v237
  %v239 = vrot.slane %v234, %v238
  %241 = vmatprep.subr.mxu0 0.0
  %242 = vmatpush1.msra.mxu0 %v155
  %243 = vmatprep.subr.mxu0 0.0
  %244 = vmatpush1.msra.mxu0 %v160
  %245 = vmatprep.subr.mxu0 0.0
  %246 = vmatpush1.msra.mxu0 %v165
  %247 = vmatprep.subr.mxu0 0.0
  %248 = vmatpush1.msra.mxu0 %v170
  %249 = vmatprep.subr.mxu0 0.0
  %250 = vmatpush1.msra.mxu0 %v175
  %251 = vmatprep.subr.mxu0 0.0
  %252 = vmatpush1.msra.mxu0 %v180
  %253 = vmatprep.subr.mxu0 0.0
  %254 = vmatpush1.msra.mxu0 %v185
  %255 = vmatprep.subr.mxu0 0.0
  %256 = vmatpush1.msra.mxu0 %v190
  %257 = vmatprep.subr.mxu0 0.0
  %258 = vmatpush1.msra.mxu0 %v195
  %259 = vmatprep.subr.mxu0 0.0
  %260 = vmatpush1.msra.mxu0 %v200
  %261 = vmatprep.subr.mxu0 0.0
  %262 = vmatpush1.msra.mxu0 %v205
  %263 = vmatprep.subr.mxu0 0.0
  %264 = vmatpush1.msra.mxu0 %v210
  %265 = vmatprep.subr.mxu0 0.0
  %266 = vmatpush1.msra.mxu0 %v215
  %267 = vmatprep.subr.mxu0 0.0
  %268 = vmatpush1.msra.mxu0 %v220
  %269 = vmatprep.subr.mxu0 0.0
  %270 = vmatpush1.msra.mxu0 %v225
  %271 = vmatprep.subr.mxu0 0.0
  %272 = vmatpush1.msra.mxu0 %v230
  %273 = vmatprep.subr.mxu0 0.0
  %274 = vmatpush1.msra.mxu0 0.0
  %275 = vmatprep.subr.mxu0 0.0
  %276 = vmatpush1.msra.mxu0 0.0
  %277 = vmatprep.subr.mxu0 0.0
  %278 = vmatpush1.msra.mxu0 0.0
  %279 = vmatprep.subr.mxu0 0.0
  %280 = vmatpush1.msra.mxu0 0.0
  %281 = vmatprep.subr.mxu0 0.0
  %282 = vmatpush1.msra.mxu0 0.0
  %283 = vmatprep.subr.mxu0 0.0
  %284 = vmatpush1.msra.mxu0 0.0
  %285 = vmatprep.subr.mxu0 0.0
  %286 = vmatpush1.msra.mxu0 0.0
  %287 = vmatprep.subr.mxu0 0.0
  %288 = vmatpush1.msra.mxu0 0.0
  %289 = vmatprep.subr.mxu0 0.0
  %290 = vmatpush1.msra.mxu0 0.0
  %291 = vmatprep.subr.mxu0 0.0
  %292 = vmatpush1.msra.mxu0 0.0
  %293 = vmatprep.subr.mxu0 0.0
  %294 = vmatpush1.msra.mxu0 0.0
  %295 = vmatprep.subr.mxu0 0.0
  %296 = vmatpush1.msra.mxu0 0.0
  %297 = vmatprep.subr.mxu0 0.0
  %298 = vmatpush1.msra.mxu0 0.0
  %299 = vmatprep.subr.mxu0 0.0
  %300 = vmatpush1.msra.mxu0 0.0
  %301 = vmatprep.subr.mxu0 0.0
  %302 = vmatpush1.msra.mxu0 0.0
  %303 = vmatprep.subr.mxu0 0.0
  %304 = vmatpush1.msra.mxu0 0.0
  %305 = vmatprep.mubr.f32.mxu0 0.0
  %306 = vmatmul.mubr.f32.gmra.mrb[0].mxu0 %v233
  %v307 = vpop.f32.mrb[0].mxu0
  %v308 = vadd.f32 %v239, %v307
  %v309 = vpop.f32.mrb[0].mxu0
  %310 = vdwg.mxu0
  %vm311 = vcmask 1024
  %312 = vst.msk [vmem:[%s4] sm:$0x3] %vm311, %v308
  // Predicated region
  $region18: #{value_net_forward.7} parent=0 // pred_check
    _
  $region19: #{value_net_forward.7} parent=0 // pred_check_branch
    %314 = sbr.rel (0) target = $region21
  $region20: #{value_net_forward.7} parent=0 // pred_region
    _
  $region21: #{value_net_forward.7} parent=0 // pred_fallthru
    _
  // Predicated region
  $region22: #{value_net_forward.7} parent=0 // pred_check
    _
  $region23: #{value_net_forward.7} parent=0 // pred_check_branch
    %316 = sbr.rel (0) target = $region25
  $region24: #{value_net_forward.7} parent=0 // pred_region
    _
  $region25: #{value_net_forward.7} parent=0 // pred_fallthru
    _

</llo_original>
